<compile_context>
chip_gen: v5e
topology: v5e:2x2
jax: 0.10.0
libtpu: 0.0.40
codegen_flags: <defaults>
</compile_context>

<pallas_src>
import functools

import numpy as np
import jax
import jax.numpy as jnp
from jax import lax
from jax.experimental import pallas as pl
from jax.experimental.pallas import tpu as pltpu

LANE = 128
SUBLANE = 8


def _round_up(n, m):
    return ((n + m - 1) // m) * m


# ----------------------------------------------------------------------------
# Pallas kernels — one fused kernel per SharedNet branch
# ----------------------------------------------------------------------------
def _mlp_fused_kernel(x_ref, w1_ref, b1_ref, w2_ref, b2_ref, o_ref):
    """relu(x @ w1 + b1) @ w2 + b2 — hidden activation stays in VMEM/vregs.

    w1/w2 are bf16 MXU operands (Dhid padded to 128 lanes); accumulation and
    elementwise math are f32.
    """
    x = x_ref[...].astype(jnp.bfloat16)
    h = jnp.dot(x, w1_ref[...], preferred_element_type=jnp.float32) + b1_ref[...]
    h = jnp.maximum(h, 0.0)
    y = jnp.dot(h.astype(jnp.bfloat16), w2_ref[...],
                preferred_element_type=jnp.float32) + b2_ref[...]
    o_ref[...] = y.astype(o_ref.dtype)


def _matmul_bias_relu_kernel(x_ref, w_ref, b_ref, o_ref):
    """relu(x @ w + b) — conv1d lowered (at prepare time) to a Toeplitz matmul."""
    y = jnp.dot(x_ref[...].astype(jnp.bfloat16), w_ref[...],
                preferred_element_type=jnp.float32) + b_ref[...]
    o_ref[...] = jnp.maximum(y, 0.0).astype(o_ref.dtype)


def _lstm_bottleneck_kernel(x_ref, wih_ref, whh_ref, b_ref, bnw_ref, bnb_ref,
                            o_ref, *, Bp, Hp):
    """1-layer LSTM (h_T) + bottleneck Linear, fully fused.

    x:   (T*Bp, F) bf16  time-major input, batch padded to Bp=8 sublanes
    wih: (F, 4*Hp) bf16  whh: (Hp, 4*Hp) bf16  b: (1, 4*Hp) f32
    bnw: (Hp, Dpad) bf16 bnb: (1, Dpad) f32
    Every per-step slice is a whole (8,128) tile; the output store is unmasked.
    """
    TB, _ = x_ref.shape
    T = TB // Bp
    # Hoisted input projection: one big MXU matmul + bias for all steps.
    xproj = (jnp.dot(x_ref[...], wih_ref[...], preferred_element_type=jnp.float32)
             + b_ref[...])                              # (T*Bp, 4*Hp) f32
    whh = whh_ref[...]                                  # recurrent weights loaded once
    h = jnp.zeros((Bp, Hp), jnp.float32)
    c = jnp.zeros((Bp, Hp), jnp.float32)
    # TODO(synk): verify in the bundle dump that the whh weight pushes are hoisted
    # out of the unrolled steps; if not, drive the MXU explicitly
    # (pltpu.matmul_push_rhs once + matmul_acc_lhs per step).
    for t in range(T):                                  # static unroll (T small & fixed)
        gates = xproj[t * Bp:(t + 1) * Bp, :] + jnp.dot(
            h.astype(jnp.bfloat16), whh, preferred_element_type=jnp.float32)
        # PyTorch gate ordering: input, forget, cell, output — lane-aligned slices.
        i = jax.nn.sigmoid(gates[:, 0 * Hp:1 * Hp])
        f = jax.nn.sigmoid(gates[:, 1 * Hp:2 * Hp])
        g = jnp.tanh(gates[:, 2 * Hp:3 * Hp])
        o = jax.nn.sigmoid(gates[:, 3 * Hp:4 * Hp])
        c = f * c + i * g
        h = o * jnp.tanh(c)
    y = jnp.dot(h.astype(jnp.bfloat16), bnw_ref[...],
                preferred_element_type=jnp.float32) + bnb_ref[...]
    o_ref[...] = y.astype(o_ref.dtype)                  # (Bp, Dpad) full (8,128) store


# ----------------------------------------------------------------------------
# pallas_call helpers (single whole-array VMEM blocks; shapes are tiny so no grid;
# for non-trivial batch add a grid over M with dimension_semantics=("parallel",)
# to shard across v7x's 2 TensorCores)
# ----------------------------------------------------------------------------
def _vmem_spec(shape):
    zero = (0,) * len(shape)
    return pl.BlockSpec(shape, lambda: zero, memory_space=pltpu.MemorySpace.VMEM)


def _cost(flops, transcendentals, out_shape, *args):
    bytes_accessed = int(np.prod(out_shape.shape)) * jnp.dtype(out_shape.dtype).itemsize
    for a in args:
        bytes_accessed += int(a.size) * a.dtype.itemsize
    return pl.CostEstimate(flops=int(flops), transcendentals=int(transcendentals),
                           bytes_accessed=int(bytes_accessed))


def _run_fused(kernel, out_shape, cost, *args):
    return pl.pallas_call(
        kernel,
        out_shape=out_shape,
        in_specs=[_vmem_spec(a.shape) for a in args],
        out_specs=_vmem_spec(out_shape.shape),
        cost_estimate=cost,
    )(*args)


# ----------------------------------------------------------------------------
# One-time ("checkpoint load time") parameter preparation
# ----------------------------------------------------------------------------
def prepare_shared_net_params(raw, config):
    """Transposes, lane/sublane padding, bf16 casts and the conv->Toeplitz lowering
    are done ONCE here, never per forward call."""
    mt = config['model_type']
    prep = {'model_type': mt}
    bf16 = jnp.bfloat16
    if mt == 'lstm':
        w_ih = np.asarray(raw['lstm_w_ih'], np.float32)          # (4H, F)
        w_hh = np.asarray(raw['lstm_w_hh'], np.float32)          # (4H, H)
        bsum = (np.asarray(raw['lstm_b_ih'], np.float32)
                + np.asarray(raw['lstm_b_hh'], np.float32))      # (4H,)
        bn_w = np.asarray(raw['bn_w'], np.float32)               # (Dout, H)
        bn_b = np.asarray(raw['bn_b'], np.float32)               # (Dout,)
        H = w_hh.shape[1]
        F = w_ih.shape[1]
        Dout = bn_w.shape[0]
        Hp = _round_up(H, LANE)
        Dpad = _round_up(Dout, LANE)
        wih_p = np.zeros((F, 4 * Hp), np.float32)
        whh_p = np.zeros((Hp, 4 * Hp), np.float32)
        b_p = np.zeros((1, 4 * Hp), np.float32)
        for gt in range(4):                                      # i, f, g, o
            wih_p[:, gt * Hp:gt * Hp + H] = w_ih[gt * H:(gt + 1) * H, :].T
            whh_p[:H, gt * Hp:gt * Hp + H] = w_hh[gt * H:(gt + 1) * H, :].T
            b_p[0, gt * Hp:gt * Hp + H] = bsum[gt * H:(gt + 1) * H]
        bnw_p = np.zeros((Hp, Dpad), np.float32)
        bnw_p[:H, :Dout] = bn_w.T
        bnb_p = np.zeros((1, Dpad), np.float32)
        bnb_p[0, :Dout] = bn_b
        prep.update(wih=jnp.asarray(wih_p).astype(bf16),
                    whh=jnp.asarray(whh_p).astype(bf16),
                    b=jnp.asarray(b_p),                          # bias stays f32
                    bnw=jnp.asarray(bnw_p).astype(bf16),
                    bnb=jnp.asarray(bnb_p),
                    F=F, Hp=Hp, Dout=Dout, Dpad=Dpad)
    elif mt == 'conv1d':
        w = np.asarray(raw['conv_w'], np.float32)                # (Cout, Cin, K)
        b = np.asarray(raw['conv_b'], np.float32)                # (Cout,)
        Cout, Cin, K = w.shape
        L = config['seq_len']
        padding = config.get('conv_padding', 1)
        Lout = L + 2 * padding - K + 1
        out_dim = Cout * Lout
        out_pad = _round_up(out_dim, LANE)
        # Toeplitz lowering: out[b, co*Lout+l] = sum_{ci,k} w[co,ci,k]*x[b, ci*L + l+k-pad]
        # (zero padding folded into the weight matrix).
        # TODO(synk): for realistic C/L (esp. on v7x, 64 MiB VMEM) replace with K
        # per-tap (Cin,Cout) matmuls on lane-shifted inputs or an Lout-tiled grid;
        # the Toeplitz weight is O(C^2 L^2) bytes and inflates FLOPs by ~L/K.
        wbig = np.zeros((Cin * L, out_pad), np.float32)
        for co in range(Cout):
            for ci in range(Cin):
                for k in range(K):
                    off = k - padding
                    l_lo = max(0, -off)
                    l_hi = min(Lout, L - off)
                    if l_hi > l_lo:
                        ls = np.arange(l_lo, l_hi)
                        wbig[ci * L + ls + off, co * Lout + ls] = w[co, ci, k]
        bbig = np.zeros((1, out_pad), np.float32)
        for co in range(Cout):
            bbig[0, co * Lout:(co + 1) * Lout] = b[co]
        prep.update(wbig=jnp.asarray(wbig).astype(bf16), bbig=jnp.asarray(bbig),
                    Cin=Cin, L=L, out_dim=out_dim, out_pad=out_pad)
    else:  # mlp
        fc_w = np.asarray(raw['fc_w'], np.float32)               # (Dhid, Din)
        fc_b = np.asarray(raw['fc_b'], np.float32)               # (Dhid,)
        bn_w = np.asarray(raw['bn_w'], np.float32)               # (Dout, Dhid)
        bn_b = np.asarray(raw['bn_b'], np.float32)               # (Dout,)
        Dhid, Din = fc_w.shape
        Dout = bn_w.shape[0]
        Dhp = _round_up(Dhid, LANE)                              # lane-dense hidden
        Dpad = _round_up(Dout, LANE)
        w1 = np.zeros((Din, Dhp), np.float32)
        w1[:, :Dhid] = fc_w.T
        b1 = np.zeros((1, Dhp), np.float32)
        b1[0, :Dhid] = fc_b
        w2 = np.zeros((Dhp, Dpad), np.float32)
        w2[:Dhid, :Dout] = bn_w.T
        b2 = np.zeros((1, Dpad), np.float32)
        b2[0, :Dout] = bn_b
        prep.update(w1=jnp.asarray(w1).astype(bf16), b1=jnp.asarray(b1),
                    w2=jnp.asarray(w2).astype(bf16), b2=jnp.asarray(b2),
                    Dhp=Dhp, Dout=Dout, Dpad=Dpad)
    return prep


# ----------------------------------------------------------------------------
# SharedNet.forward (one fused pallas_call per branch; run under jax.jit so the
# tiny relayout / un-padding glue fuses into a single dispatch)
# ----------------------------------------------------------------------------
def shared_net_forward(prep, config, x):
    mt = config['model_type']
    if mt == 'lstm':
        B, T, F = x.shape
        assert F == prep['F'], "input feature dim does not match prepared LSTM weights"
        Hp, Dpad = prep['Hp'], prep['Dpad']
        Bp = max(SUBLANE, _round_up(B, SUBLANE))
        # Single fused relayout: time-major, batch padded to 8 sublanes, bf16.
        # Under jit this is one small copy feeding the kernel; in-kernel every
        # per-step slice is a whole (8,128) tile and the output store is unmasked.
        x_tm = jnp.zeros((T, Bp, F), jnp.bfloat16)
        x_tm = x_tm.at[:, :B, :].set(jnp.transpose(x, (1, 0, 2)).astype(jnp.bfloat16))
        x_tm = x_tm.reshape(T * Bp, F)
        out_shape = jax.ShapeDtypeStruct((Bp, Dpad), jnp.float32)
        args = (x_tm, prep['wih'], prep['whh'], prep['b'], prep['bnw'], prep['bnb'])
        flops = (2 * T * Bp * F * 4 * Hp            # hoisted input projection
                 + T * 2 * Bp * Hp * 4 * Hp         # recurrence
                 + 2 * Bp * Hp * Dpad)              # bottleneck
        trans = T * Bp * 5 * Hp                     # sigmoid/tanh gates + tanh(c)
        out = _run_fused(functools.partial(_lstm_bottleneck_kernel, Bp=Bp, Hp=Hp),
                         out_shape, _cost(flops, trans, out_shape, *args), *args)
        # Drop batch/lane padding (downstream could consume the padded block directly).
        return out[:B, :prep['Dout']]
    elif mt == 'conv1d':
        bs = config['batch_size']
        # Toeplitz weights bake seq_len / padding at prepare time — guard shapes.
        assert x.shape == (bs, prep['Cin'], prep['L']), \
            "conv1d input shape does not match prepared Toeplitz weights"
        # conv1d + ReLU + .view(batch, -1) as ONE lane-dense matmul kernel.
        x_flat = x.reshape(bs, -1)                  # contiguous reshape — no copy
        out_shape = jax.ShapeDtypeStruct((bs, prep['out_pad']), x.dtype)
        args = (x_flat, prep['wbig'], prep['bbig'])
        flops = 2 * bs * x_flat.shape[1] * prep['out_pad']
        out = _run_fused(_matmul_bias_relu_kernel, out_shape,
                         _cost(flops, 0, out_shape, *args), *args)
        return out[:, :prep['out_dim']]             # already flattened in NCL order
    else:
        # base Linear+ReLU output is already (B, Dhid), so .view(batch, -1) is identity
        # and both linears fuse into a single kernel.
        bs = x.shape[0]
        out_shape = jax.ShapeDtypeStruct((bs, prep['Dpad']), x.dtype)
        args = (x, prep['w1'], prep['b1'], prep['w2'], prep['b2'])
        flops = 2 * bs * x.shape[1] * prep['Dhp'] + 2 * bs * prep['Dhp'] * prep['Dpad']
        out = _run_fused(_mlp_fused_kernel, out_shape,
                         _cost(flops, 0, out_shape, *args), *args)
        return out[:, :prep['Dout']]


# ----------------------------------------------------------------------------
# Pure-JAX references (f32; for correctness check)
# ----------------------------------------------------------------------------
def _ref_linear(x, w, b, relu=False):
    y = x @ w.T + b
    return jnp.maximum(y, 0.0) if relu else y


def _ref_lstm_last(x, w_ih, w_hh, b_ih, b_hh):
    B, T, F = x.shape
    H = w_hh.shape[1]

    def step(carry, x_t):
        h, c = carry
        g = x_t @ w_ih.T + h @ w_hh.T + b_ih + b_hh
        i = jax.nn.sigmoid(g[:, :H])
        f = jax.nn.sigmoid(g[:, H:2 * H])
        gg = jnp.tanh(g[:, 2 * H:3 * H])
        o = jax.nn.sigmoid(g[:, 3 * H:])
        c = f * c + i * gg
        h = o * jnp.tanh(c)
        return (h, c), None

    (h, _), _ = lax.scan(step, (jnp.zeros((B, H)), jnp.zeros((B, H))),
                         jnp.transpose(x, (1, 0, 2)))
    return h


def _ref_conv1d_relu(x, w, b):
    y = lax.conv_general_dilated(x, w, (1,), ((1, 1),),
                                 dimension_numbers=('NCH', 'OIH', 'NCH'))
    return jnp.maximum(y + b[None, :, None], 0.0)


# ----------------------------------------------------------------------------
if __name__ == "__main__":
    key = jax.random.PRNGKey(0)
    ks = jax.random.split(key, 16)
    scale = 0.1
    # Tolerance sized for bf16 MXU operands with f32 accumulation.
    TOL = dict(atol=1e-2, rtol=1e-2)

    # shapes
    B = 2
    T, F, H = 8, 16, 32              # lstm
    Cin, Cout, L, K = 4, 8, 16, 3    # conv1d
    D_in, D_hid, D_out = 32, 64, 16  # mlp + bottleneck

    # ---- lstm branch ----
    p_lstm_raw = {
        'lstm_w_ih': jax.random.normal(ks[0], (4 * H, F), jnp.float32) * scale,
        'lstm_w_hh': jax.random.normal(ks[1], (4 * H, H), jnp.float32) * scale,
        'lstm_b_ih': jax.random.normal(ks[2], (4 * H,), jnp.float32) * scale,
        'lstm_b_hh': jax.random.normal(ks[3], (4 * H,), jnp.float32) * scale,
        'bn_w': jax.random.normal(ks[4], (D_out, H), jnp.float32) * scale,
        'bn_b': jax.random.normal(ks[5], (D_out,), jnp.float32) * scale,
    }
    x_lstm = jax.random.normal(ks[6], (B, T, F), jnp.float32)
    cfg_lstm = {'model_type': 'lstm', 'batch_size': B}
    p_lstm = prepare_shared_net_params(p_lstm_raw, cfg_lstm)
    lstm_fwd = jax.jit(lambda xx: shared_net_forward(p_lstm, cfg_lstm, xx))
    out_lstm = jax.block_until_ready(lstm_fwd(x_lstm))
    ref_lstm = _ref_linear(
        _ref_lstm_last(x_lstm, p_lstm_raw['lstm_w_ih'], p_lstm_raw['lstm_w_hh'],
                       p_lstm_raw['lstm_b_ih'], p_lstm_raw['lstm_b_hh']),
        p_lstm_raw['bn_w'], p_lstm_raw['bn_b'])
    assert out_lstm.shape == (B, D_out)
    assert jnp.allclose(out_lstm, ref_lstm, **TOL)

    # ---- conv1d branch ----
    p_conv_raw = {
        'conv_w': jax.random.normal(ks[7], (Cout, Cin, K), jnp.float32) * scale,
        'conv_b': jax.random.normal(ks[8], (Cout,), jnp.float32) * scale,
    }
    x_conv = jax.random.normal(ks[9], (B, Cin, L), jnp.float32)
    cfg_conv = {'model_type': 'conv1d', 'batch_size': B, 'seq_len': L,
                'conv_padding': 1}
    p_conv = prepare_shared_net_params(p_conv_raw, cfg_conv)
    conv_fwd = jax.jit(lambda xx: shared_net_forward(p_conv, cfg_conv, xx))
    out_conv = jax.block_until_ready(conv_fwd(x_conv))
    ref_conv = _ref_conv1d_relu(x_conv, p_conv_raw['conv_w'],
                                p_conv_raw['conv_b']).reshape(B, -1)
    assert out_conv.shape == (B, Cout * L)
    assert jnp.allclose(out_conv, ref_conv, **TOL)

    # ---- default (mlp) branch ----
    p_mlp_raw = {
        'fc_w': jax.random.normal(ks[10], (D_hid, D_in), jnp.float32) * scale,
        'fc_b': jax.random.normal(ks[11], (D_hid,), jnp.float32) * scale,
        'bn_w': jax.random.normal(ks[12], (D_out, D_hid), jnp.float32) * scale,
        'bn_b': jax.random.normal(ks[13], (D_out,), jnp.float32) * scale,
    }
    x_mlp = jax.random.normal(ks[14], (B, D_in), jnp.float32)
    cfg_mlp = {'model_type': 'mlp', 'batch_size': B}
    p_mlp = prepare_shared_net_params(p_mlp_raw, cfg_mlp)
    mlp_fwd = jax.jit(lambda xx: shared_net_forward(p_mlp, cfg_mlp, xx))
    out_mlp = jax.block_until_ready(mlp_fwd(x_mlp))
    ref_mlp = _ref_linear(
        _ref_linear(x_mlp, p_mlp_raw['fc_w'], p_mlp_raw['fc_b'], relu=True).reshape(B, -1),
        p_mlp_raw['bn_w'], p_mlp_raw['bn_b'])
    assert out_mlp.shape == (B, D_out)
    assert jnp.allclose(out_mlp, ref_mlp, **TOL)

    # TODO(synk): the original module loads arbitrary pretrained sub-modules from a
    # checkpoint; here base_network/bottleneck are fixed synthetic architectures, and
    # the conv branch is specialized (at prepare time) to the configured seq_len.
    print("KERNEL_OK")
</pallas_src>

<mosaic_0001>
module attributes {stable_mosaic.version = 11 : i64} {
  func.func @_lstm_bottleneck_kernel(%arg0: memref<64x16xbf16, #tpu.memory_space<vmem>>, %arg1: memref<16x512xbf16, #tpu.memory_space<vmem>>, %arg2: memref<128x512xbf16, #tpu.memory_space<vmem>>, %arg3: memref<1x512xf32, #tpu.memory_space<vmem>>, %arg4: memref<128x128xbf16, #tpu.memory_space<vmem>>, %arg5: memref<1x128xf32, #tpu.memory_space<vmem>>, %arg6: memref<8x128xf32, #tpu.memory_space<vmem>>) attributes {dimension_semantics = [], scalar_prefetch = 0 : i64, scratch_operands = 0 : i64, tpu.core_type = #tpu.core_type<tc>} {
    %c0 = arith.constant 0 : index
    %c0_0 = arith.constant 0 : index
    %0 = vector.load %arg0[%c0, %c0_0] : memref<64x16xbf16, #tpu.memory_space<vmem>>, vector<64x16xbf16>
    %c0_1 = arith.constant 0 : index
    %c0_2 = arith.constant 0 : index
    %1 = vector.load %arg1[%c0_1, %c0_2] : memref<16x512xbf16, #tpu.memory_space<vmem>>, vector<16x512xbf16>
    %cst = arith.constant dense<0.000000e+00> : vector<64x512xf32>
    %2 = tpu.matmul %0, %1, %cst {dimension_numbers = #tpu.dot_dimension_numbers<[1], [0], [0], [1], [0, 0, 1, 1], [], []>} : vector<64x16xbf16>, vector<16x512xbf16>, vector<64x512xf32> -> vector<64x512xf32>
    %c0_3 = arith.constant 0 : index
    %c0_4 = arith.constant 0 : index
    %3 = vector.load %arg3[%c0_3, %c0_4] : memref<1x512xf32, #tpu.memory_space<vmem>>, vector<1x512xf32>
    %4 = vector.broadcast %3 : vector<1x512xf32> to vector<64x512xf32>
    %5 = arith.addf %2, %4 : vector<64x512xf32>
    %c0_5 = arith.constant 0 : index
    %c0_6 = arith.constant 0 : index
    %6 = vector.load %arg2[%c0_5, %c0_6] : memref<128x512xbf16, #tpu.memory_space<vmem>>, vector<128x512xbf16>
    %cst_7 = arith.constant 0.000000e+00 : f32
    %7 = vector.broadcast %cst_7 : f32 to vector<8x128xf32>
    %cst_8 = arith.constant 0.000000e+00 : f32
    %8 = vector.broadcast %cst_8 : f32 to vector<8x128xf32>
    %9 = vector.extract_strided_slice %5 {offsets = [0, 0], sizes = [8, 512], strides = [1, 1]} : vector<64x512xf32> to vector<8x512xf32>
    %10 = arith.truncf %7 : vector<8x128xf32> to vector<8x128xbf16>
    %cst_9 = arith.constant dense<0.000000e+00> : vector<8x512xf32>
    %11 = tpu.matmul %10, %6, %cst_9 {dimension_numbers = #tpu.dot_dimension_numbers<[1], [0], [0], [1], [0, 0, 1, 1], [], []>} : vector<8x128xbf16>, vector<128x512xbf16>, vector<8x512xf32> -> vector<8x512xf32>
    %12 = arith.addf %9, %11 : vector<8x512xf32>
    %13 = vector.extract_strided_slice %12 {offsets = [0, 0], sizes = [8, 128], strides = [1, 1]} : vector<8x512xf32> to vector<8x128xf32>
    %14 = arith.negf %13 : vector<8x128xf32>
    %15 = math.exp %14 : vector<8x128xf32>
    %cst_10 = arith.constant 1.000000e+00 : f32
    %16 = vector.broadcast %cst_10 : f32 to vector<8x128xf32>
    %17 = arith.addf %16, %15 : vector<8x128xf32>
    %18 = arith.divf %16, %17 : vector<8x128xf32>
    %19 = vector.extract_strided_slice %12 {offsets = [0, 128], sizes = [8, 128], strides = [1, 1]} : vector<8x512xf32> to vector<8x128xf32>
    %20 = arith.negf %19 : vector<8x128xf32>
    %21 = math.exp %20 : vector<8x128xf32>
    %cst_11 = arith.constant 1.000000e+00 : f32
    %22 = vector.broadcast %cst_11 : f32 to vector<8x128xf32>
    %23 = arith.addf %22, %21 : vector<8x128xf32>
    %24 = arith.divf %22, %23 : vector<8x128xf32>
    %25 = vector.extract_strided_slice %12 {offsets = [0, 256], sizes = [8, 128], strides = [1, 1]} : vector<8x512xf32> to vector<8x128xf32>
    %26 = math.tanh %25 : vector<8x128xf32>
    %27 = vector.extract_strided_slice %12 {offsets = [0, 384], sizes = [8, 128], strides = [1, 1]} : vector<8x512xf32> to vector<8x128xf32>
    %28 = arith.negf %27 : vector<8x128xf32>
    %29 = math.exp %28 : vector<8x128xf32>
    %cst_12 = arith.constant 1.000000e+00 : f32
    %30 = vector.broadcast %cst_12 : f32 to vector<8x128xf32>
    %31 = arith.addf %30, %29 : vector<8x128xf32>
    %32 = arith.divf %30, %31 : vector<8x128xf32>
    %33 = arith.mulf %24, %8 : vector<8x128xf32>
    %34 = arith.mulf %18, %26 : vector<8x128xf32>
    %35 = arith.addf %33, %34 : vector<8x128xf32>
    %36 = math.tanh %35 : vector<8x128xf32>
    %37 = arith.mulf %32, %36 : vector<8x128xf32>
    %38 = vector.extract_strided_slice %5 {offsets = [8, 0], sizes = [8, 512], strides = [1, 1]} : vector<64x512xf32> to vector<8x512xf32>
    %39 = arith.truncf %37 : vector<8x128xf32> to vector<8x128xbf16>
    %cst_13 = arith.constant dense<0.000000e+00> : vector<8x512xf32>
    %40 = tpu.matmul %39, %6, %cst_13 {dimension_numbers = #tpu.dot_dimension_numbers<[1], [0], [0], [1], [0, 0, 1, 1], [], []>} : vector<8x128xbf16>, vector<128x512xbf16>, vector<8x512xf32> -> vector<8x512xf32>
    %41 = arith.addf %38, %40 : vector<8x512xf32>
    %42 = vector.extract_strided_slice %41 {offsets = [0, 0], sizes = [8, 128], strides = [1, 1]} : vector<8x512xf32> to vector<8x128xf32>
    %43 = arith.negf %42 : vector<8x128xf32>
    %44 = math.exp %43 : vector<8x128xf32>
    %cst_14 = arith.constant 1.000000e+00 : f32
    %45 = vector.broadcast %cst_14 : f32 to vector<8x128xf32>
    %46 = arith.addf %45, %44 : vector<8x128xf32>
    %47 = arith.divf %45, %46 : vector<8x128xf32>
    %48 = vector.extract_strided_slice %41 {offsets = [0, 128], sizes = [8, 128], strides = [1, 1]} : vector<8x512xf32> to vector<8x128xf32>
    %49 = arith.negf %48 : vector<8x128xf32>
    %50 = math.exp %49 : vector<8x128xf32>
    %cst_15 = arith.constant 1.000000e+00 : f32
    %51 = vector.broadcast %cst_15 : f32 to vector<8x128xf32>
    %52 = arith.addf %51, %50 : vector<8x128xf32>
    %53 = arith.divf %51, %52 : vector<8x128xf32>
    %54 = vector.extract_strided_slice %41 {offsets = [0, 256], sizes = [8, 128], strides = [1, 1]} : vector<8x512xf32> to vector<8x128xf32>
    %55 = math.tanh %54 : vector<8x128xf32>
    %56 = vector.extract_strided_slice %41 {offsets = [0, 384], sizes = [8, 128], strides = [1, 1]} : vector<8x512xf32> to vector<8x128xf32>
    %57 = arith.negf %56 : vector<8x128xf32>
    %58 = math.exp %57 : vector<8x128xf32>
    %cst_16 = arith.constant 1.000000e+00 : f32
    %59 = vector.broadcast %cst_16 : f32 to vector<8x128xf32>
    %60 = arith.addf %59, %58 : vector<8x128xf32>
    %61 = arith.divf %59, %60 : vector<8x128xf32>
    %62 = arith.mulf %53, %35 : vector<8x128xf32>
    %63 = arith.mulf %47, %55 : vector<8x128xf32>
    %64 = arith.addf %62, %63 : vector<8x128xf32>
    %65 = math.tanh %64 : vector<8x128xf32>
    %66 = arith.mulf %61, %65 : vector<8x128xf32>
    %67 = vector.extract_strided_slice %5 {offsets = [16, 0], sizes = [8, 512], strides = [1, 1]} : vector<64x512xf32> to vector<8x512xf32>
    %68 = arith.truncf %66 : vector<8x128xf32> to vector<8x128xbf16>
    %cst_17 = arith.constant dense<0.000000e+00> : vector<8x512xf32>
    %69 = tpu.matmul %68, %6, %cst_17 {dimension_numbers = #tpu.dot_dimension_numbers<[1], [0], [0], [1], [0, 0, 1, 1], [], []>} : vector<8x128xbf16>, vector<128x512xbf16>, vector<8x512xf32> -> vector<8x512xf32>
    %70 = arith.addf %67, %69 : vector<8x512xf32>
    %71 = vector.extract_strided_slice %70 {offsets = [0, 0], sizes = [8, 128], strides = [1, 1]} : vector<8x512xf32> to vector<8x128xf32>
    %72 = arith.negf %71 : vector<8x128xf32>
    %73 = math.exp %72 : vector<8x128xf32>
    %cst_18 = arith.constant 1.000000e+00 : f32
    %74 = vector.broadcast %cst_18 : f32 to vector<8x128xf32>
    %75 = arith.addf %74, %73 : vector<8x128xf32>
    %76 = arith.divf %74, %75 : vector<8x128xf32>
    %77 = vector.extract_strided_slice %70 {offsets = [0, 128], sizes = [8, 128], strides = [1, 1]} : vector<8x512xf32> to vector<8x128xf32>
    %78 = arith.negf %77 : vector<8x128xf32>
    %79 = math.exp %78 : vector<8x128xf32>
    %cst_19 = arith.constant 1.000000e+00 : f32
    %80 = vector.broadcast %cst_19 : f32 to vector<8x128xf32>
    %81 = arith.addf %80, %79 : vector<8x128xf32>
    %82 = arith.divf %80, %81 : vector<8x128xf32>
    %83 = vector.extract_strided_slice %70 {offsets = [0, 256], sizes = [8, 128], strides = [1, 1]} : vector<8x512xf32> to vector<8x128xf32>
    %84 = math.tanh %83 : vector<8x128xf32>
    %85 = vector.extract_strided_slice %70 {offsets = [0, 384], sizes = [8, 128], strides = [1, 1]} : vector<8x512xf32> to vector<8x128xf32>
    %86 = arith.negf %85 : vector<8x128xf32>
    %87 = math.exp %86 : vector<8x128xf32>
    %cst_20 = arith.constant 1.000000e+00 : f32
    %88 = vector.broadcast %cst_20 : f32 to vector<8x128xf32>
    %89 = arith.addf %88, %87 : vector<8x128xf32>
    %90 = arith.divf %88, %89 : vector<8x128xf32>
    %91 = arith.mulf %82, %64 : vector<8x128xf32>
    %92 = arith.mulf %76, %84 : vector<8x128xf32>
    %93 = arith.addf %91, %92 : vector<8x128xf32>
    %94 = math.tanh %93 : vector<8x128xf32>
    %95 = arith.mulf %90, %94 : vector<8x128xf32>
    %96 = vector.extract_strided_slice %5 {offsets = [24, 0], sizes = [8, 512], strides = [1, 1]} : vector<64x512xf32> to vector<8x512xf32>
    %97 = arith.truncf %95 : vector<8x128xf32> to vector<8x128xbf16>
    %cst_21 = arith.constant dense<0.000000e+00> : vector<8x512xf32>
    %98 = tpu.matmul %97, %6, %cst_21 {dimension_numbers = #tpu.dot_dimension_numbers<[1], [0], [0], [1], [0, 0, 1, 1], [], []>} : vector<8x128xbf16>, vector<128x512xbf16>, vector<8x512xf32> -> vector<8x512xf32>
    %99 = arith.addf %96, %98 : vector<8x512xf32>
    %100 = vector.extract_strided_slice %99 {offsets = [0, 0], sizes = [8, 128], strides = [1, 1]} : vector<8x512xf32> to vector<8x128xf32>
    %101 = arith.negf %100 : vector<8x128xf32>
    %102 = math.exp %101 : vector<8x128xf32>
    %cst_22 = arith.constant 1.000000e+00 : f32
    %103 = vector.broadcast %cst_22 : f32 to vector<8x128xf32>
    %104 = arith.addf %103, %102 : vector<8x128xf32>
    %105 = arith.divf %103, %104 : vector<8x128xf32>
    %106 = vector.extract_strided_slice %99 {offsets = [0, 128], sizes = [8, 128], strides = [1, 1]} : vector<8x512xf32> to vector<8x128xf32>
    %107 = arith.negf %106 : vector<8x128xf32>
    %108 = math.exp %107 : vector<8x128xf32>
    %cst_23 = arith.constant 1.000000e+00 : f32
    %109 = vector.broadcast %cst_23 : f32 to vector<8x128xf32>
    %110 = arith.addf %109, %108 : vector<8x128xf32>
    %111 = arith.divf %109, %110 : vector<8x128xf32>
    %112 = vector.extract_strided_slice %99 {offsets = [0, 256], sizes = [8, 128], strides = [1, 1]} : vector<8x512xf32> to vector<8x128xf32>
    %113 = math.tanh %112 : vector<8x128xf32>
    %114 = vector.extract_strided_slice %99 {offsets = [0, 384], sizes = [8, 128], strides = [1, 1]} : vector<8x512xf32> to vector<8x128xf32>
    %115 = arith.negf %114 : vector<8x128xf32>
    %116 = math.exp %115 : vector<8x128xf32>
    %cst_24 = arith.constant 1.000000e+00 : f32
    %117 = vector.broadcast %cst_24 : f32 to vector<8x128xf32>
    %118 = arith.addf %117, %116 : vector<8x128xf32>
    %119 = arith.divf %117, %118 : vector<8x128xf32>
    %120 = arith.mulf %111, %93 : vector<8x128xf32>
    %121 = arith.mulf %105, %113 : vector<8x128xf32>
    %122 = arith.addf %120, %121 : vector<8x128xf32>
    %123 = math.tanh %122 : vector<8x128xf32>
    %124 = arith.mulf %119, %123 : vector<8x128xf32>
    %125 = vector.extract_strided_slice %5 {offsets = [32, 0], sizes = [8, 512], strides = [1, 1]} : vector<64x512xf32> to vector<8x512xf32>
    %126 = arith.truncf %124 : vector<8x128xf32> to vector<8x128xbf16>
    %cst_25 = arith.constant dense<0.000000e+00> : vector<8x512xf32>
    %127 = tpu.matmul %126, %6, %cst_25 {dimension_numbers = #tpu.dot_dimension_numbers<[1], [0], [0], [1], [0, 0, 1, 1], [], []>} : vector<8x128xbf16>, vector<128x512xbf16>, vector<8x512xf32> -> vector<8x512xf32>
    %128 = arith.addf %125, %127 : vector<8x512xf32>
    %129 = vector.extract_strided_slice %128 {offsets = [0, 0], sizes = [8, 128], strides = [1, 1]} : vector<8x512xf32> to vector<8x128xf32>
    %130 = arith.negf %129 : vector<8x128xf32>
    %131 = math.exp %130 : vector<8x128xf32>
    %cst_26 = arith.constant 1.000000e+00 : f32
    %132 = vector.broadcast %cst_26 : f32 to vector<8x128xf32>
    %133 = arith.addf %132, %131 : vector<8x128xf32>
    %134 = arith.divf %132, %133 : vector<8x128xf32>
    %135 = vector.extract_strided_slice %128 {offsets = [0, 128], sizes = [8, 128], strides = [1, 1]} : vector<8x512xf32> to vector<8x128xf32>
    %136 = arith.negf %135 : vector<8x128xf32>
    %137 = math.exp %136 : vector<8x128xf32>
    %cst_27 = arith.constant 1.000000e+00 : f32
    %138 = vector.broadcast %cst_27 : f32 to vector<8x128xf32>
    %139 = arith.addf %138, %137 : vector<8x128xf32>
    %140 = arith.divf %138, %139 : vector<8x128xf32>
    %141 = vector.extract_strided_slice %128 {offsets = [0, 256], sizes = [8, 128], strides = [1, 1]} : vector<8x512xf32> to vector<8x128xf32>
    %142 = math.tanh %141 : vector<8x128xf32>
    %143 = vector.extract_strided_slice %128 {offsets = [0, 384], sizes = [8, 128], strides = [1, 1]} : vector<8x512xf32> to vector<8x128xf32>
    %144 = arith.negf %143 : vector<8x128xf32>
    %145 = math.exp %144 : vector<8x128xf32>
    %cst_28 = arith.constant 1.000000e+00 : f32
    %146 = vector.broadcast %cst_28 : f32 to vector<8x128xf32>
    %147 = arith.addf %146, %145 : vector<8x128xf32>
    %148 = arith.divf %146, %147 : vector<8x128xf32>
    %149 = arith.mulf %140, %122 : vector<8x128xf32>
    %150 = arith.mulf %134, %142 : vector<8x128xf32>
    %151 = arith.addf %149, %150 : vector<8x128xf32>
    %152 = math.tanh %151 : vector<8x128xf32>
    %153 = arith.mulf %148, %152 : vector<8x128xf32>
    %154 = vector.extract_strided_slice %5 {offsets = [40, 0], sizes = [8, 512], strides = [1, 1]} : vector<64x512xf32> to vector<8x512xf32>
    %155 = arith.truncf %153 : vector<8x128xf32> to vector<8x128xbf16>
    %cst_29 = arith.constant dense<0.000000e+00> : vector<8x512xf32>
    %156 = tpu.matmul %155, %6, %cst_29 {dimension_numbers = #tpu.dot_dimension_numbers<[1], [0], [0], [1], [0, 0, 1, 1], [], []>} : vector<8x128xbf16>, vector<128x512xbf16>, vector<8x512xf32> -> vector<8x512xf32>
    %157 = arith.addf %154, %156 : vector<8x512xf32>
    %158 = vector.extract_strided_slice %157 {offsets = [0, 0], sizes = [8, 128], strides = [1, 1]} : vector<8x512xf32> to vector<8x128xf32>
    %159 = arith.negf %158 : vector<8x128xf32>
    %160 = math.exp %159 : vector<8x128xf32>
    %cst_30 = arith.constant 1.000000e+00 : f32
    %161 = vector.broadcast %cst_30 : f32 to vector<8x128xf32>
    %162 = arith.addf %161, %160 : vector<8x128xf32>
    %163 = arith.divf %161, %162 : vector<8x128xf32>
    %164 = vector.extract_strided_slice %157 {offsets = [0, 128], sizes = [8, 128], strides = [1, 1]} : vector<8x512xf32> to vector<8x128xf32>
    %165 = arith.negf %164 : vector<8x128xf32>
    %166 = math.exp %165 : vector<8x128xf32>
    %cst_31 = arith.constant 1.000000e+00 : f32
    %167 = vector.broadcast %cst_31 : f32 to vector<8x128xf32>
    %168 = arith.addf %167, %166 : vector<8x128xf32>
    %169 = arith.divf %167, %168 : vector<8x128xf32>
    %170 = vector.extract_strided_slice %157 {offsets = [0, 256], sizes = [8, 128], strides = [1, 1]} : vector<8x512xf32> to vector<8x128xf32>
    %171 = math.tanh %170 : vector<8x128xf32>
    %172 = vector.extract_strided_slice %157 {offsets = [0, 384], sizes = [8, 128], strides = [1, 1]} : vector<8x512xf32> to vector<8x128xf32>
    %173 = arith.negf %172 : vector<8x128xf32>
    %174 = math.exp %173 : vector<8x128xf32>
    %cst_32 = arith.constant 1.000000e+00 : f32
    %175 = vector.broadcast %cst_32 : f32 to vector<8x128xf32>
    %176 = arith.addf %175, %174 : vector<8x128xf32>
    %177 = arith.divf %175, %176 : vector<8x128xf32>
    %178 = arith.mulf %169, %151 : vector<8x128xf32>
    %179 = arith.mulf %163, %171 : vector<8x128xf32>
    %180 = arith.addf %178, %179 : vector<8x128xf32>
    %181 = math.tanh %180 : vector<8x128xf32>
    %182 = arith.mulf %177, %181 : vector<8x128xf32>
    %183 = vector.extract_strided_slice %5 {offsets = [48, 0], sizes = [8, 512], strides = [1, 1]} : vector<64x512xf32> to vector<8x512xf32>
    %184 = arith.truncf %182 : vector<8x128xf32> to vector<8x128xbf16>
    %cst_33 = arith.constant dense<0.000000e+00> : vector<8x512xf32>
    %185 = tpu.matmul %184, %6, %cst_33 {dimension_numbers = #tpu.dot_dimension_numbers<[1], [0], [0], [1], [0, 0, 1, 1], [], []>} : vector<8x128xbf16>, vector<128x512xbf16>, vector<8x512xf32> -> vector<8x512xf32>
    %186 = arith.addf %183, %185 : vector<8x512xf32>
    %187 = vector.extract_strided_slice %186 {offsets = [0, 0], sizes = [8, 128], strides = [1, 1]} : vector<8x512xf32> to vector<8x128xf32>
    %188 = arith.negf %187 : vector<8x128xf32>
    %189 = math.exp %188 : vector<8x128xf32>
    %cst_34 = arith.constant 1.000000e+00 : f32
    %190 = vector.broadcast %cst_34 : f32 to vector<8x128xf32>
    %191 = arith.addf %190, %189 : vector<8x128xf32>
    %192 = arith.divf %190, %191 : vector<8x128xf32>
    %193 = vector.extract_strided_slice %186 {offsets = [0, 128], sizes = [8, 128], strides = [1, 1]} : vector<8x512xf32> to vector<8x128xf32>
    %194 = arith.negf %193 : vector<8x128xf32>
    %195 = math.exp %194 : vector<8x128xf32>
    %cst_35 = arith.constant 1.000000e+00 : f32
    %196 = vector.broadcast %cst_35 : f32 to vector<8x128xf32>
    %197 = arith.addf %196, %195 : vector<8x128xf32>
    %198 = arith.divf %196, %197 : vector<8x128xf32>
    %199 = vector.extract_strided_slice %186 {offsets = [0, 256], sizes = [8, 128], strides = [1, 1]} : vector<8x512xf32> to vector<8x128xf32>
    %200 = math.tanh %199 : vector<8x128xf32>
    %201 = vector.extract_strided_slice %186 {offsets = [0, 384], sizes = [8, 128], strides = [1, 1]} : vector<8x512xf32> to vector<8x128xf32>
    %202 = arith.negf %201 : vector<8x128xf32>
    %203 = math.exp %202 : vector<8x128xf32>
    %cst_36 = arith.constant 1.000000e+00 : f32
    %204 = vector.broadcast %cst_36 : f32 to vector<8x128xf32>
    %205 = arith.addf %204, %203 : vector<8x128xf32>
    %206 = arith.divf %204, %205 : vector<8x128xf32>
    %207 = arith.mulf %198, %180 : vector<8x128xf32>
    %208 = arith.mulf %192, %200 : vector<8x128xf32>
    %209 = arith.addf %207, %208 : vector<8x128xf32>
    %210 = math.tanh %209 : vector<8x128xf32>
    %211 = arith.mulf %206, %210 : vector<8x128xf32>
    %212 = vector.extract_strided_slice %5 {offsets = [56, 0], sizes = [8, 512], strides = [1, 1]} : vector<64x512xf32> to vector<8x512xf32>
    %213 = arith.truncf %211 : vector<8x128xf32> to vector<8x128xbf16>
    %cst_37 = arith.constant dense<0.000000e+00> : vector<8x512xf32>
    %214 = tpu.matmul %213, %6, %cst_37 {dimension_numbers = #tpu.dot_dimension_numbers<[1], [0], [0], [1], [0, 0, 1, 1], [], []>} : vector<8x128xbf16>, vector<128x512xbf16>, vector<8x512xf32> -> vector<8x512xf32>
    %215 = arith.addf %212, %214 : vector<8x512xf32>
    %216 = vector.extract_strided_slice %215 {offsets = [0, 0], sizes = [8, 128], strides = [1, 1]} : vector<8x512xf32> to vector<8x128xf32>
    %217 = arith.negf %216 : vector<8x128xf32>
    %218 = math.exp %217 : vector<8x128xf32>
    %cst_38 = arith.constant 1.000000e+00 : f32
    %219 = vector.broadcast %cst_38 : f32 to vector<8x128xf32>
    %220 = arith.addf %219, %218 : vector<8x128xf32>
    %221 = arith.divf %219, %220 : vector<8x128xf32>
    %222 = vector.extract_strided_slice %215 {offsets = [0, 128], sizes = [8, 128], strides = [1, 1]} : vector<8x512xf32> to vector<8x128xf32>
    %223 = arith.negf %222 : vector<8x128xf32>
    %224 = math.exp %223 : vector<8x128xf32>
    %cst_39 = arith.constant 1.000000e+00 : f32
    %225 = vector.broadcast %cst_39 : f32 to vector<8x128xf32>
    %226 = arith.addf %225, %224 : vector<8x128xf32>
    %227 = arith.divf %225, %226 : vector<8x128xf32>
    %228 = vector.extract_strided_slice %215 {offsets = [0, 256], sizes = [8, 128], strides = [1, 1]} : vector<8x512xf32> to vector<8x128xf32>
    %229 = math.tanh %228 : vector<8x128xf32>
    %230 = vector.extract_strided_slice %215 {offsets = [0, 384], sizes = [8, 128], strides = [1, 1]} : vector<8x512xf32> to vector<8x128xf32>
    %231 = arith.negf %230 : vector<8x128xf32>
    %232 = math.exp %231 : vector<8x128xf32>
    %cst_40 = arith.constant 1.000000e+00 : f32
    %233 = vector.broadcast %cst_40 : f32 to vector<8x128xf32>
    %234 = arith.addf %233, %232 : vector<8x128xf32>
    %235 = arith.divf %233, %234 : vector<8x128xf32>
    %236 = arith.mulf %227, %209 : vector<8x128xf32>
    %237 = arith.mulf %221, %229 : vector<8x128xf32>
    %238 = arith.addf %236, %237 : vector<8x128xf32>
    %239 = math.tanh %238 : vector<8x128xf32>
    %240 = arith.mulf %235, %239 : vector<8x128xf32>
    %241 = arith.truncf %240 : vector<8x128xf32> to vector<8x128xbf16>
    %c0_41 = arith.constant 0 : index
    %c0_42 = arith.constant 0 : index
    %242 = vector.load %arg4[%c0_41, %c0_42] : memref<128x128xbf16, #tpu.memory_space<vmem>>, vector<128x128xbf16>
    %cst_43 = arith.constant dense<0.000000e+00> : vector<8x128xf32>
    %243 = tpu.matmul %241, %242, %cst_43 {dimension_numbers = #tpu.dot_dimension_numbers<[1], [0], [0], [1], [0, 0, 1, 1], [], []>} : vector<8x128xbf16>, vector<128x128xbf16>, vector<8x128xf32> -> vector<8x128xf32>
    %c0_44 = arith.constant 0 : index
    %c0_45 = arith.constant 0 : index
    %244 = vector.load %arg5[%c0_44, %c0_45] : memref<1x128xf32, #tpu.memory_space<vmem>>, vector<1x128xf32>
    %245 = vector.broadcast %244 : vector<1x128xf32> to vector<8x128xf32>
    %246 = arith.addf %243, %245 : vector<8x128xf32>
    %c0_46 = arith.constant 0 : index
    %c0_47 = arith.constant 0 : index
    %247 = vector.load %arg6[%c0_46, %c0_47] : memref<8x128xf32, #tpu.memory_space<vmem>>, vector<8x128xf32>
    tpu.vector_store %arg6[%c0_46, %c0_47], %246 {strides = array<i32>} : memref<8x128xf32, #tpu.memory_space<vmem>>, vector<8x128xf32>,
    return
  }
}

</mosaic_0001>

<llo_original>
// kernel: _lambda_.1
$region0: #{_lambda_.1}
  #allocation0 [shape = 'u32[]', space=smem, size = 0x4, offset = 0x4, fixed_abs, tag = 'smem constant byte address 0x4 - core index']
  #allocation1 [shape = 'u32[72,128]{1,0:T(1,128)}', space=vmem, size = 0x9000, scoped, tag = 'internal scratch']
  %s0 = inlined_call_operand.vmem [shape: bf16[64,16], index: 0, kind: input, shape index: {}]
  %s1 = inlined_call_operand.hbm [shape: bf16[16,512], index: 1, kind: input, shape index: {}]
  %s2 = inlined_call_operand.hbm [shape: bf16[128,512], index: 2, kind: input, shape index: {}]
  %s3 = inlined_call_operand.vmem [shape: f32[1,512], index: 3, kind: input, shape index: {}]
  %s4 = inlined_call_operand.vmem [shape: bf16[128,128], index: 4, kind: input, shape index: {}]
  %s5 = inlined_call_operand.vmem [shape: f32[1,128], index: 5, kind: input, shape index: {}]
  %s6 = inlined_call_operand.vmem [shape: f32[8,128], index: 6, kind: output, shape index: {}]
  %s7 = sld [smem:[#allocation0]]
  $region42: #{_lambda_.1} parent=0
    _
  %s9 = ssub.s32 1, %s7
  %s10 = scalar_select 0, %s9, %s7
  $region1: #{_lambda_.1} parent=0
    #allocation2 [shape = 'u8[16384]{0}', space=vmem, size = 0x4000, scoped, tag = 'input window, operand 1, single buffered']
    #allocation3 [shape = 's32[1]{0}', space=sflag, size = 0x4, scoped, tag = 'scoped memory for _lambda_.1']
    #allocation4 [shape = 'u8[131072]{0}', space=vmem, size = 0x20000, scoped, tag = 'input window, operand 2, single buffered']
    #allocation5 [shape = 's32[1]{0}', space=sflag, size = 0x4, scoped, tag = 'scoped memory for _lambda_.1']
    %11 = vsyncpa [#allocation3], 0
    %12 = vsyncpa [#allocation5], 0
    // Predicated region
    $region2: #{_lambda_.1} parent=1 // pred_check
      _
    $region3: #{_lambda_.1} parent=1 // pred_check_branch
      %14 = sbr.rel (0) target = $region5
    $region4: #{_lambda_.1} parent=1 // pred_region
      _
    $region5: #{_lambda_.1} parent=1 // pred_fallthru
      _
    // Predicated region
    $region6: #{_lambda_.1} parent=1 // pred_check
      _
    $region7: #{_lambda_.1} parent=1 // pred_check_branch
      %16 = sbr.rel (0) target = $region9
    $region8: #{_lambda_.1} parent=1 // pred_region
      %18 = vsyncadd [#allocation3], 0
      %s19 = sshll.u32 %s1, 4
      %s20 = int_to_ptr.hbm [resolvable:$true] %s19
      %s21 = sshll.u32 [#allocation2], 4
      %s22 = int_to_ptr.vmem [resolvable:$true] %s21
      %27 = dma.hbm_to_vmem [thread:$0]  %s20, 512, %s22, [#allocation3], 256, 256, 16
    $region9: #{_lambda_.1} parent=1 // pred_fallthru
      _
    // Predicated region
    $region10: #{_lambda_.1} parent=1 // pred_check
      _
    $region11: #{_lambda_.1} parent=1 // pred_check_branch
      %29 = sbr.rel (0) target = $region13
    $region12: #{_lambda_.1} parent=1 // pred_region
      %31 = vsyncadd [#allocation5], 0
      %s32 = sshll.u32 %s2, 4
      %s33 = int_to_ptr.hbm [resolvable:$true] %s32
      %s34 = sshll.u32 [#allocation4], 4
      %s35 = int_to_ptr.vmem [resolvable:$true] %s34
      %40 = dma.hbm_to_vmem [thread:$0]  %s33, 4096, %s35, [#allocation5], 256, 256, 16
    $region13: #{_lambda_.1} parent=1 // pred_fallthru
      _
    // Predicated region
    $region14: #{_lambda_.1} parent=1 // pred_check
      _
    $region15: #{_lambda_.1} parent=1 // pred_check_branch
      %42 = sbr.rel (0) target = $region17
    $region16: #{_lambda_.1} parent=1 // pred_region
      _
    $region17: #{_lambda_.1} parent=1 // pred_fallthru
      _
    // Predicated region
    $region18: #{_lambda_.1} parent=1 // pred_check
      _
    $region19: #{_lambda_.1} parent=1 // pred_check_branch
      %44 = sbr.rel (0) target = $region21
    $region20: #{_lambda_.1} parent=1 // pred_region
      _
    $region21: #{_lambda_.1} parent=1 // pred_fallthru
      _
    // Predicated region
    $region22: #{_lambda_.1} parent=1 // pred_check
      _
    $region23: #{_lambda_.1} parent=1 // pred_check_branch
      %46 = sbr.rel (0) target = $region25
    $region24: #{_lambda_.1} parent=1 // pred_region
      _
    $region25: #{_lambda_.1} parent=1 // pred_fallthru
      _
    // Predicated region
    $region26: #{_lambda_.1} parent=1 // pred_check
      _
    $region27: #{_lambda_.1} parent=1 // pred_check_branch
      %48 = sbr.rel (0) target = $region29
    $region28: #{_lambda_.1} parent=1 // pred_region
      %50 = dma.done [#allocation3], 512
    $region29: #{_lambda_.1} parent=1 // pred_fallthru
      _
    // Predicated region
    $region30: #{_lambda_.1} parent=1 // pred_check
      _
    $region31: #{_lambda_.1} parent=1 // pred_check_branch
      %52 = sbr.rel (0) target = $region33
    $region32: #{_lambda_.1} parent=1 // pred_region
      %54 = dma.done [#allocation5], 4096
    $region33: #{_lambda_.1} parent=1 // pred_fallthru
      _
    %v56 = vld [vmem:[%s0] sm:$0xf]
    %v57 = vld [vmem:[%s0 + $0x4] sm:$0xf]
    %v58 = vld [vmem:[%s0 + $0x8] sm:$0xf]
    %v59 = vld [vmem:[%s0 + $0xc] sm:$0xf]
    %v60 = vld [vmem:[%s0 + $0x10] sm:$0xf]
    %v61 = vld [vmem:[%s0 + $0x14] sm:$0xf]
    %v62 = vld [vmem:[%s0 + $0x18] sm:$0xf]
    %v63 = vld [vmem:[%s0 + $0x1c] sm:$0xf]
    %v64 = vld [vmem:[#allocation2] sm:$0xff]
    %v65 = vld [vmem:[#allocation2 + $0x8] sm:$0xff]
    %v66 = vld [vmem:[#allocation2 + $0x10] sm:$0xff]
    %v67 = vld [vmem:[#allocation2 + $0x18] sm:$0xff]
    %v68 = vld [vmem:[%s3] sm:$0xf]
    %v70 = vperm.slane %v68, 0
    %v71 = vperm.slane %v68, 1
    %v72 = vperm.slane %v68, 2
    %v73 = vperm.slane %v68, 3
    %v86 = vunpack.c.l.b16 %v56
    %v87 = vunpack.c.l.b16 %v57
    %v88 = vunpack.c.l.b16 %v58
    %v89 = vunpack.c.l.b16 %v59
    %v90 = vunpack.c.l.b16 %v60
    %v91 = vunpack.c.l.b16 %v61
    %v92 = vunpack.c.l.b16 %v62
    %v93 = vunpack.c.l.b16 %v63
    %v94 = vpack.c.b16 %v87, %v86
    %v95 = vpack.c.b16 %v89, %v88
    %v96 = vpack.c.b16 %v91, %v90
    %v97 = vpack.c.b16 %v93, %v92
    %v102 = vunpack.c.l.b16 %v64
    %v103 = vunpack.c.h.b16 %v64
    %v104 = vunpack.c.l.b16 %v65
    %v105 = vunpack.c.h.b16 %v65
    %v106 = vunpack.c.l.b16 %v66
    %v107 = vunpack.c.h.b16 %v66
    %v108 = vunpack.c.l.b16 %v67
    %v109 = vunpack.c.h.b16 %v67
    %v110 = vpack.c.b16 %v106, %v102
    %v111 = vpack.c.b16 %v107, %v103
    %v112 = vpack.c.b16 %v108, %v104
    %v113 = vpack.c.b16 %v109, %v105
    %vm118 = vcmask 130048
    %v120 = vsel %vm118, %v94, 0
    %v123 = vsel %vm118, %v95, 0
    %v126 = vsel %vm118, %v96, 0
    %v129 = vsel %vm118, %v97, 0
    %131 = vmatpush.bf16.msra.mxu0 0
    %132 = vmatpush.bf16.msra.mxu0 0
    %133 = vmatpush.bf16.msra.mxu0 0
    %134 = vmatpush.bf16.msra.mxu0 0
    %135 = vmatpush.bf16.msra.mxu0 0
    %136 = vmatpush.bf16.msra.mxu0 0
    %137 = vmatpush.bf16.msra.mxu0 0
    %138 = vmatpush.bf16.msra.mxu0 %v110
    %139 = vmatmul.bf16.gmra.mxu0 %v120
    %v140 = vpop.f32.mrf.mxu0
    %v141 = vadd.f32 %v70, %v140
    %v142 = vpop.f32.mrf.mxu0
    %v143 = vadd.f32 %v70, %v142
    %144 = vmatmul.bf16.gmra.mxu0 %v123
    %v145 = vpop.f32.mrf.mxu0
    %v146 = vadd.f32 %v70, %v145
    %v147 = vpop.f32.mrf.mxu0
    %v148 = vadd.f32 %v70, %v147
    %149 = vmatmul.bf16.gmra.mxu0 %v126
    %v150 = vpop.f32.mrf.mxu0
    %v151 = vadd.f32 %v70, %v150
    %v152 = vpop.f32.mrf.mxu0
    %v153 = vadd.f32 %v70, %v152
    %154 = vmatmul.bf16.gmra.mxu0 %v129
    %v155 = vpop.f32.mrf.mxu0
    %v156 = vadd.f32 %v70, %v155
    %v157 = vpop.f32.mrf.mxu0
    %v158 = vadd.f32 %v70, %v157
    %159 = vdwg.mxu0
    %160 = vmatpush.bf16.msra.mxu0 0
    %161 = vmatpush.bf16.msra.mxu0 0
    %162 = vmatpush.bf16.msra.mxu0 0
    %163 = vmatpush.bf16.msra.mxu0 0
    %164 = vmatpush.bf16.msra.mxu0 0
    %165 = vmatpush.bf16.msra.mxu0 0
    %166 = vmatpush.bf16.msra.mxu0 0
    %167 = vmatpush.bf16.msra.mxu0 %v111
    %168 = vmatmul.bf16.gmra.mxu0 %v120
    %v169 = vpop.f32.mrf.mxu0
    %v170 = vadd.f32 %v71, %v169
    %v171 = vpop.f32.mrf.mxu0
    %v172 = vadd.f32 %v71, %v171
    %173 = vmatmul.bf16.gmra.mxu0 %v123
    %v174 = vpop.f32.mrf.mxu0
    %v175 = vadd.f32 %v71, %v174
    %v176 = vpop.f32.mrf.mxu0
    %v177 = vadd.f32 %v71, %v176
    %178 = vmatmul.bf16.gmra.mxu0 %v126
    %v179 = vpop.f32.mrf.mxu0
    %v180 = vadd.f32 %v71, %v179
    %v181 = vpop.f32.mrf.mxu0
    %v182 = vadd.f32 %v71, %v181
    %183 = vmatmul.bf16.gmra.mxu0 %v129
    %v184 = vpop.f32.mrf.mxu0
    %v185 = vadd.f32 %v71, %v184
    %v186 = vpop.f32.mrf.mxu0
    %v187 = vadd.f32 %v71, %v186
    %188 = vdwg.mxu0
    %189 = vmatpush.bf16.msra.mxu0 0
    %190 = vmatpush.bf16.msra.mxu0 0
    %191 = vmatpush.bf16.msra.mxu0 0
    %192 = vmatpush.bf16.msra.mxu0 0
    %193 = vmatpush.bf16.msra.mxu0 0
    %194 = vmatpush.bf16.msra.mxu0 0
    %195 = vmatpush.bf16.msra.mxu0 0
    %196 = vmatpush.bf16.msra.mxu0 %v112
    %197 = vmatmul.bf16.gmra.mxu0 %v120
    %v198 = vpop.f32.mrf.mxu0
    %v199 = vadd.f32 %v72, %v198
    %v200 = vpop.f32.mrf.mxu0
    %v201 = vadd.f32 %v72, %v200
    %202 = vmatmul.bf16.gmra.mxu0 %v123
    %v203 = vpop.f32.mrf.mxu0
    %v204 = vadd.f32 %v72, %v203
    %v205 = vpop.f32.mrf.mxu0
    %v206 = vadd.f32 %v72, %v205
    %207 = vmatmul.bf16.gmra.mxu0 %v126
    %v208 = vpop.f32.mrf.mxu0
    %v209 = vadd.f32 %v72, %v208
    %v210 = vpop.f32.mrf.mxu0
    %v211 = vadd.f32 %v72, %v210
    %212 = vmatmul.bf16.gmra.mxu0 %v129
    %v213 = vpop.f32.mrf.mxu0
    %v214 = vadd.f32 %v72, %v213
    %v215 = vpop.f32.mrf.mxu0
    %v216 = vadd.f32 %v72, %v215
    %217 = vdwg.mxu0
    %218 = vmatpush.bf16.msra.mxu0 0
    %219 = vmatpush.bf16.msra.mxu0 0
    %220 = vmatpush.bf16.msra.mxu0 0
    %221 = vmatpush.bf16.msra.mxu0 0
    %222 = vmatpush.bf16.msra.mxu0 0
    %223 = vmatpush.bf16.msra.mxu0 0
    %224 = vmatpush.bf16.msra.mxu0 0
    %225 = vmatpush.bf16.msra.mxu0 %v113
    %226 = vmatmul.bf16.gmra.mxu0 %v120
    %v227 = vpop.f32.mrf.mxu0
    %v228 = vadd.f32 %v73, %v227
    %v229 = vpop.f32.mrf.mxu0
    %v230 = vadd.f32 %v73, %v229
    %231 = vmatmul.bf16.gmra.mxu0 %v123
    %v232 = vpop.f32.mrf.mxu0
    %v233 = vadd.f32 %v73, %v232
    %v234 = vpop.f32.mrf.mxu0
    %v235 = vadd.f32 %v73, %v234
    %236 = vmatmul.bf16.gmra.mxu0 %v126
    %v237 = vpop.f32.mrf.mxu0
    %v238 = vadd.f32 %v73, %v237
    %v239 = vpop.f32.mrf.mxu0
    %v240 = vadd.f32 %v73, %v239
    %241 = vmatmul.bf16.gmra.mxu0 %v129
    %v242 = vpop.f32.mrf.mxu0
    %v243 = vadd.f32 %v73, %v242
    %v244 = vpop.f32.mrf.mxu0
    %v245 = vadd.f32 %v73, %v244
    %246 = vdwg.mxu0
    %v247 = vld [vmem:[#allocation4] sm:$0xff]
    %v248 = vld [vmem:[#allocation4 + $0x8] sm:$0xff]
    %v249 = vld [vmem:[#allocation4 + $0x10] sm:$0xff]
    %v250 = vld [vmem:[#allocation4 + $0x18] sm:$0xff]
    %v251 = vld [vmem:[#allocation4 + $0x20] sm:$0xff]
    %v252 = vld [vmem:[#allocation4 + $0x28] sm:$0xff]
    %v253 = vld [vmem:[#allocation4 + $0x30] sm:$0xff]
    %v254 = vld [vmem:[#allocation4 + $0x38] sm:$0xff]
    %v255 = vld [vmem:[#allocation4 + $0x40] sm:$0xff]
    %v256 = vld [vmem:[#allocation4 + $0x48] sm:$0xff]
    %v257 = vld [vmem:[#allocation4 + $0x50] sm:$0xff]
    %v258 = vld [vmem:[#allocation4 + $0x58] sm:$0xff]
    %v259 = vld [vmem:[#allocation4 + $0x60] sm:$0xff]
    %v260 = vld [vmem:[#allocation4 + $0x68] sm:$0xff]
    %v261 = vld [vmem:[#allocation4 + $0x70] sm:$0xff]
    %v262 = vld [vmem:[#allocation4 + $0x78] sm:$0xff]
    %v263 = vld [vmem:[#allocation4 + $0x80] sm:$0xff]
    %v264 = vld [vmem:[#allocation4 + $0x88] sm:$0xff]
    %v265 = vld [vmem:[#allocation4 + $0x90] sm:$0xff]
    %v266 = vld [vmem:[#allocation4 + $0x98] sm:$0xff]
    %v267 = vld [vmem:[#allocation4 + $0xa0] sm:$0xff]
    %v268 = vld [vmem:[#allocation4 + $0xa8] sm:$0xff]
    %v269 = vld [vmem:[#allocation4 + $0xb0] sm:$0xff]
    %v270 = vld [vmem:[#allocation4 + $0xb8] sm:$0xff]
    %v271 = vld [vmem:[#allocation4 + $0xc0] sm:$0xff]
    %v272 = vld [vmem:[#allocation4 + $0xc8] sm:$0xff]
    %v273 = vld [vmem:[#allocation4 + $0xd0] sm:$0xff]
    %v274 = vld [vmem:[#allocation4 + $0xd8] sm:$0xff]
    %v275 = vld [vmem:[#allocation4 + $0xe0] sm:$0xff]
    %v276 = vld [vmem:[#allocation4 + $0xe8] sm:$0xff]
    %v277 = vld [vmem:[#allocation4 + $0xf0] sm:$0xff]
    %v278 = vld [vmem:[#allocation4 + $0xf8] sm:$0xff]
    %v311 = vunpack.c.l.b16 %v247
    %v312 = vunpack.c.h.b16 %v247
    %v313 = vunpack.c.l.b16 %v248
    %v314 = vunpack.c.h.b16 %v248
    %v315 = vunpack.c.l.b16 %v249
    %v316 = vunpack.c.h.b16 %v249
    %v317 = vunpack.c.l.b16 %v250
    %v318 = vunpack.c.h.b16 %v250
    %v319 = vunpack.c.l.b16 %v251
    %v320 = vunpack.c.h.b16 %v251
    %v321 = vunpack.c.l.b16 %v252
    %v322 = vunpack.c.h.b16 %v252
    %v323 = vunpack.c.l.b16 %v253
    %v324 = vunpack.c.h.b16 %v253
    %v325 = vunpack.c.l.b16 %v254
    %v326 = vunpack.c.h.b16 %v254
    %v327 = vunpack.c.l.b16 %v255
    %v328 = vunpack.c.h.b16 %v255
    %v329 = vunpack.c.l.b16 %v256
    %v330 = vunpack.c.h.b16 %v256
    %v331 = vunpack.c.l.b16 %v257
    %v332 = vunpack.c.h.b16 %v257
    %v333 = vunpack.c.l.b16 %v258
    %v334 = vunpack.c.h.b16 %v258
    %v335 = vunpack.c.l.b16 %v259
    %v336 = vunpack.c.h.b16 %v259
    %v337 = vunpack.c.l.b16 %v260
    %v338 = vunpack.c.h.b16 %v260
    %v339 = vunpack.c.l.b16 %v261
    %v340 = vunpack.c.h.b16 %v261
    %v341 = vunpack.c.l.b16 %v262
    %v342 = vunpack.c.h.b16 %v262
    %v343 = vunpack.c.l.b16 %v263
    %v344 = vunpack.c.h.b16 %v263
    %v345 = vunpack.c.l.b16 %v264
    %v346 = vunpack.c.h.b16 %v264
    %v347 = vunpack.c.l.b16 %v265
    %v348 = vunpack.c.h.b16 %v265
    %v349 = vunpack.c.l.b16 %v266
    %v350 = vunpack.c.h.b16 %v266
    %v351 = vunpack.c.l.b16 %v267
    %v352 = vunpack.c.h.b16 %v267
    %v353 = vunpack.c.l.b16 %v268
    %v354 = vunpack.c.h.b16 %v268
    %v355 = vunpack.c.l.b16 %v269
    %v356 = vunpack.c.h.b16 %v269
    %v357 = vunpack.c.l.b16 %v270
    %v358 = vunpack.c.h.b16 %v270
    %v359 = vunpack.c.l.b16 %v271
    %v360 = vunpack.c.h.b16 %v271
    %v361 = vunpack.c.l.b16 %v272
    %v362 = vunpack.c.h.b16 %v272
    %v363 = vunpack.c.l.b16 %v273
    %v364 = vunpack.c.h.b16 %v273
    %v365 = vunpack.c.l.b16 %v274
    %v366 = vunpack.c.h.b16 %v274
    %v367 = vunpack.c.l.b16 %v275
    %v368 = vunpack.c.h.b16 %v275
    %v369 = vunpack.c.l.b16 %v276
    %v370 = vunpack.c.h.b16 %v276
    %v371 = vunpack.c.l.b16 %v277
    %v372 = vunpack.c.h.b16 %v277
    %v373 = vunpack.c.l.b16 %v278
    %v374 = vunpack.c.h.b16 %v278
    %v375 = vpack.c.b16 %v315, %v311
    %v376 = vpack.c.b16 %v316, %v312
    %v377 = vpack.c.b16 %v317, %v313
    %v378 = vpack.c.b16 %v318, %v314
    %v379 = vpack.c.b16 %v323, %v319
    %v380 = vpack.c.b16 %v324, %v320
    %v381 = vpack.c.b16 %v325, %v321
    %v382 = vpack.c.b16 %v326, %v322
    %v383 = vpack.c.b16 %v331, %v327
    %v384 = vpack.c.b16 %v332, %v328
    %v385 = vpack.c.b16 %v333, %v329
    %v386 = vpack.c.b16 %v334, %v330
    %v387 = vpack.c.b16 %v339, %v335
    %v388 = vpack.c.b16 %v340, %v336
    %v389 = vpack.c.b16 %v341, %v337
    %v390 = vpack.c.b16 %v342, %v338
    %v391 = vpack.c.b16 %v347, %v343
    %v392 = vpack.c.b16 %v348, %v344
    %v393 = vpack.c.b16 %v349, %v345
    %v394 = vpack.c.b16 %v350, %v346
    %v395 = vpack.c.b16 %v355, %v351
    %v396 = vpack.c.b16 %v356, %v352
    %v397 = vpack.c.b16 %v357, %v353
    %v398 = vpack.c.b16 %v358, %v354
    %v399 = vpack.c.b16 %v363, %v359
    %v400 = vpack.c.b16 %v364, %v360
    %v401 = vpack.c.b16 %v365, %v361
    %v402 = vpack.c.b16 %v366, %v362
    %v403 = vpack.c.b16 %v371, %v367
    %v404 = vpack.c.b16 %v372, %v368
    %v405 = vpack.c.b16 %v373, %v369
    %v406 = vpack.c.b16 %v374, %v370
    %439 = vmatpush.bf16.msra.mxu0 %v403
    %440 = vmatpush.bf16.msra.mxu0 %v399
    %441 = vmatpush.bf16.msra.mxu0 %v395
    %442 = vmatpush.bf16.msra.mxu0 %v391
    %443 = vmatpush.bf16.msra.mxu0 %v387
    %444 = vmatpush.bf16.msra.mxu0 %v383
    %445 = vmatpush.bf16.msra.mxu0 %v379
    %446 = vmatpush.bf16.msra.mxu0 %v375
    %447 = vmatmul.bf16.gmra.mxu0 0
    %v448 = vpop.f32.mrf.mxu0
    %v449 = vadd.f32 0.0, %v448
    %v450 = vpop.f32.mrf.mxu0
    %451 = vdwg.mxu0
    %452 = vmatpush.bf16.msra.mxu0 %v404
    %453 = vmatpush.bf16.msra.mxu0 %v400
    %454 = vmatpush.bf16.msra.mxu0 %v396
    %455 = vmatpush.bf16.msra.mxu0 %v392
    %456 = vmatpush.bf16.msra.mxu0 %v388
    %457 = vmatpush.bf16.msra.mxu0 %v384
    %458 = vmatpush.bf16.msra.mxu0 %v380
    %459 = vmatpush.bf16.msra.mxu0 %v376
    %460 = vmatmul.bf16.gmra.mxu0 0
    %v461 = vpop.f32.mrf.mxu0
    %v462 = vadd.f32 0.0, %v461
    %v463 = vpop.f32.mrf.mxu0
    %464 = vdwg.mxu0
    %465 = vmatpush.bf16.msra.mxu0 %v405
    %466 = vmatpush.bf16.msra.mxu0 %v401
    %467 = vmatpush.bf16.msra.mxu0 %v397
    %468 = vmatpush.bf16.msra.mxu0 %v393
    %469 = vmatpush.bf16.msra.mxu0 %v389
    %470 = vmatpush.bf16.msra.mxu0 %v385
    %471 = vmatpush.bf16.msra.mxu0 %v381
    %472 = vmatpush.bf16.msra.mxu0 %v377
    %473 = vmatmul.bf16.gmra.mxu0 0
    %v474 = vpop.f32.mrf.mxu0
    %v475 = vadd.f32 0.0, %v474
    %v476 = vpop.f32.mrf.mxu0
    %477 = vdwg.mxu0
    %478 = vmatpush.bf16.msra.mxu0 %v406
    %479 = vmatpush.bf16.msra.mxu0 %v402
    %480 = vmatpush.bf16.msra.mxu0 %v398
    %481 = vmatpush.bf16.msra.mxu0 %v394
    %482 = vmatpush.bf16.msra.mxu0 %v390
    %483 = vmatpush.bf16.msra.mxu0 %v386
    %484 = vmatpush.bf16.msra.mxu0 %v382
    %485 = vmatpush.bf16.msra.mxu0 %v378
    %486 = vmatmul.bf16.gmra.mxu0 0
    %v487 = vpop.f32.mrf.mxu0
    %v488 = vadd.f32 0.0, %v487
    %v489 = vpop.f32.mrf.mxu0
    %490 = vdwg.mxu0
    %v491 = vadd.f32 %v141, %v449
    %v492 = vadd.f32 %v170, %v462
    %v493 = vadd.f32 %v199, %v475
    %v494 = vadd.f32 %v228, %v488
    %v495 = vxor.u32 %v491, 2147483648
    %v496 = vmul.f32 %v495, 1.442695
    %v497 = vpow.pop %v496
    %v498 = vadd.f32 %v497, 1.0
    %v499 = vrcp.pop %v498
    %v500 = vmul.f32 %v498, %v499
    %v501 = vsub.f32 1.0, %v500
    %v502 = vmul.f32 %v499, %v501
    %v503 = vadd.f32 %v499, %v502
    %vm504 = vweird.f32 %v498
    %vm505 = vweird.f32 %v499
    %vm506 = vmor %vm504, %vm505
    %v507 = vsel %vm506, %v499, %v503
    %v508 = vand.u32 2147483647, %v498
    %vm509 = vcmp.eq.f32.partialorder %v508, 8.507059e+37
    %v510 = vand.u32 %v498, 2147483648
    %v511 = vor.u32 1.1754944e-38, %v510
    %v512 = vsel %vm509, %v511, %v507
    %v513 = vmul.f32 1.0, %v512
    %v514 = vxor.u32 %v492, 2147483648
    %v515 = vmul.f32 %v514, 1.442695
    %v516 = vpow.pop %v515
    %v517 = vadd.f32 %v516, 1.0
    %v518 = vrcp.pop %v517
    %v519 = vmul.f32 %v517, %v518
    %v520 = vsub.f32 1.0, %v519
    %v521 = vmul.f32 %v518, %v520
    %v522 = vadd.f32 %v518, %v521
    %vm523 = vweird.f32 %v517
    %vm524 = vweird.f32 %v518
    %vm525 = vmor %vm523, %vm524
    %v526 = vsel %vm525, %v518, %v522
    %v527 = vand.u32 2147483647, %v517
    %vm528 = vcmp.eq.f32.partialorder %v527, 8.507059e+37
    %v529 = vand.u32 %v517, 2147483648
    %v530 = vor.u32 1.1754944e-38, %v529
    %v531 = vsel %vm528, %v530, %v526
    %v532 = vmul.f32 1.0, %v531
    %v533 = vtanh.pop %v493
    %v534 = vxor.u32 %v494, 2147483648
    %v535 = vmul.f32 %v534, 1.442695
    %v536 = vpow.pop %v535
    %v537 = vadd.f32 %v536, 1.0
    %v538 = vrcp.pop %v537
    %v539 = vmul.f32 %v537, %v538
    %v540 = vsub.f32 1.0, %v539
    %v541 = vmul.f32 %v538, %v540
    %v542 = vadd.f32 %v538, %v541
    %vm543 = vweird.f32 %v537
    %vm544 = vweird.f32 %v538
    %vm545 = vmor %vm543, %vm544
    %v546 = vsel %vm545, %v538, %v542
    %v547 = vand.u32 2147483647, %v537
    %vm548 = vcmp.eq.f32.partialorder %v547, 8.507059e+37
    %v549 = vand.u32 %v537, 2147483648
    %v550 = vor.u32 1.1754944e-38, %v549
    %v551 = vsel %vm548, %v550, %v546
    %v552 = vmul.f32 1.0, %v551
    %v553 = vmul.f32 %v532, 0.0
    %v554 = vmul.f32 %v513, %v533
    %v555 = vadd.f32 %v553, %v554
    %v556 = vtanh.pop %v555
    %v557 = vmul.f32 %v552, %v556
    %v558 = vpack.c.bf16 %v557, %v557
    %559 = vmatpush.bf16.msra.mxu0 %v403
    %560 = vmatpush.bf16.msra.mxu0 %v399
    %561 = vmatpush.bf16.msra.mxu0 %v395
    %562 = vmatpush.bf16.msra.mxu0 %v391
    %563 = vmatpush.bf16.msra.mxu0 %v387
    %564 = vmatpush.bf16.msra.mxu0 %v383
    %565 = vmatpush.bf16.msra.mxu0 %v379
    %566 = vmatpush.bf16.msra.mxu0 %v375
    %567 = vmatmul.bf16.gmra.mxu0 %v558
    %v568 = vpop.f32.mrf.mxu0
    %v569 = vadd.f32 0.0, %v568
    %v570 = vpop.f32.mrf.mxu0
    %571 = vdwg.mxu0
    %572 = vmatpush.bf16.msra.mxu0 %v404
    %573 = vmatpush.bf16.msra.mxu0 %v400
    %574 = vmatpush.bf16.msra.mxu0 %v396
    %575 = vmatpush.bf16.msra.mxu0 %v392
    %576 = vmatpush.bf16.msra.mxu0 %v388
    %577 = vmatpush.bf16.msra.mxu0 %v384
    %578 = vmatpush.bf16.msra.mxu0 %v380
    %579 = vmatpush.bf16.msra.mxu0 %v376
    %580 = vmatmul.bf16.gmra.mxu0 %v558
    %v581 = vpop.f32.mrf.mxu0
    %v582 = vadd.f32 0.0, %v581
    %v583 = vpop.f32.mrf.mxu0
    %584 = vdwg.mxu0
    %585 = vmatpush.bf16.msra.mxu0 %v405
    %586 = vmatpush.bf16.msra.mxu0 %v401
    %587 = vmatpush.bf16.msra.mxu0 %v397
    %588 = vmatpush.bf16.msra.mxu0 %v393
    %589 = vmatpush.bf16.msra.mxu0 %v389
    %590 = vmatpush.bf16.msra.mxu0 %v385
    %591 = vmatpush.bf16.msra.mxu0 %v381
    %592 = vmatpush.bf16.msra.mxu0 %v377
    %593 = vmatmul.bf16.gmra.mxu0 %v558
    %v594 = vpop.f32.mrf.mxu0
    %v595 = vadd.f32 0.0, %v594
    %v596 = vpop.f32.mrf.mxu0
    %597 = vdwg.mxu0
    %598 = vmatpush.bf16.msra.mxu0 %v406
    %599 = vmatpush.bf16.msra.mxu0 %v402
    %600 = vmatpush.bf16.msra.mxu0 %v398
    %601 = vmatpush.bf16.msra.mxu0 %v394
    %602 = vmatpush.bf16.msra.mxu0 %v390
    %603 = vmatpush.bf16.msra.mxu0 %v386
    %604 = vmatpush.bf16.msra.mxu0 %v382
    %605 = vmatpush.bf16.msra.mxu0 %v378
    %606 = vmatmul.bf16.gmra.mxu0 %v558
    %v607 = vpop.f32.mrf.mxu0
    %v608 = vadd.f32 0.0, %v607
    %v609 = vpop.f32.mrf.mxu0
    %610 = vdwg.mxu0
    %v611 = vadd.f32 %v143, %v569
    %v612 = vadd.f32 %v172, %v582
    %v613 = vadd.f32 %v201, %v595
    %v614 = vadd.f32 %v230, %v608
    %v615 = vxor.u32 %v611, 2147483648
    %v616 = vmul.f32 %v615, 1.442695
    %v617 = vpow.pop %v616
    %v618 = vadd.f32 %v617, 1.0
    %v619 = vrcp.pop %v618
    %v620 = vmul.f32 %v618, %v619
    %v621 = vsub.f32 1.0, %v620
    %v622 = vmul.f32 %v619, %v621
    %v623 = vadd.f32 %v619, %v622
    %vm624 = vweird.f32 %v618
    %vm625 = vweird.f32 %v619
    %vm626 = vmor %vm624, %vm625
    %v627 = vsel %vm626, %v619, %v623
    %v628 = vand.u32 2147483647, %v618
    %vm629 = vcmp.eq.f32.partialorder %v628, 8.507059e+37
    %v630 = vand.u32 %v618, 2147483648
    %v631 = vor.u32 1.1754944e-38, %v630
    %v632 = vsel %vm629, %v631, %v627
    %v633 = vmul.f32 1.0, %v632
    %v634 = vxor.u32 %v612, 2147483648
    %v635 = vmul.f32 %v634, 1.442695
    %v636 = vpow.pop %v635
    %v637 = vadd.f32 %v636, 1.0
    %v638 = vrcp.pop %v637
    %v639 = vmul.f32 %v637, %v638
    %v640 = vsub.f32 1.0, %v639
    %v641 = vmul.f32 %v638, %v640
    %v642 = vadd.f32 %v638, %v641
    %vm643 = vweird.f32 %v637
    %vm644 = vweird.f32 %v638
    %vm645 = vmor %vm643, %vm644
    %v646 = vsel %vm645, %v638, %v642
    %v647 = vand.u32 2147483647, %v637
    %vm648 = vcmp.eq.f32.partialorder %v647, 8.507059e+37
    %v649 = vand.u32 %v637, 2147483648
    %v650 = vor.u32 1.1754944e-38, %v649
    %v651 = vsel %vm648, %v650, %v646
    %v652 = vmul.f32 1.0, %v651
    %v653 = vtanh.pop %v613
    %v654 = vxor.u32 %v614, 2147483648
    %v655 = vmul.f32 %v654, 1.442695
    %v656 = vpow.pop %v655
    %v657 = vadd.f32 %v656, 1.0
    %v658 = vrcp.pop %v657
    %v659 = vmul.f32 %v657, %v658
    %v660 = vsub.f32 1.0, %v659
    %v661 = vmul.f32 %v658, %v660
    %v662 = vadd.f32 %v658, %v661
    %vm663 = vweird.f32 %v657
    %vm664 = vweird.f32 %v658
    %vm665 = vmor %vm663, %vm664
    %v666 = vsel %vm665, %v658, %v662
    %v667 = vand.u32 2147483647, %v657
    %vm668 = vcmp.eq.f32.partialorder %v667, 8.507059e+37
    %v669 = vand.u32 %v657, 2147483648
    %v670 = vor.u32 1.1754944e-38, %v669
    %v671 = vsel %vm668, %v670, %v666
    %v672 = vmul.f32 1.0, %v671
    %v673 = vmul.f32 %v652, %v555
    %v674 = vmul.f32 %v633, %v653
    %v675 = vadd.f32 %v673, %v674
    %v676 = vtanh.pop %v675
    %v677 = vmul.f32 %v672, %v676
    %v678 = vpack.c.bf16 %v677, %v677
    %679 = vmatpush.bf16.msra.mxu0 %v403
    %680 = vmatpush.bf16.msra.mxu0 %v399
    %681 = vmatpush.bf16.msra.mxu0 %v395
    %682 = vmatpush.bf16.msra.mxu0 %v391
    %683 = vmatpush.bf16.msra.mxu0 %v387
    %684 = vmatpush.bf16.msra.mxu0 %v383
    %685 = vmatpush.bf16.msra.mxu0 %v379
    %686 = vmatpush.bf16.msra.mxu0 %v375
    %687 = vmatmul.bf16.gmra.mxu0 %v678
    %v688 = vpop.f32.mrf.mxu0
    %v689 = vadd.f32 0.0, %v688
    %v690 = vpop.f32.mrf.mxu0
    %691 = vdwg.mxu0
    %692 = vmatpush.bf16.msra.mxu0 %v404
    %693 = vmatpush.bf16.msra.mxu0 %v400
    %694 = vmatpush.bf16.msra.mxu0 %v396
    %695 = vmatpush.bf16.msra.mxu0 %v392
    %696 = vmatpush.bf16.msra.mxu0 %v388
    %697 = vmatpush.bf16.msra.mxu0 %v384
    %698 = vmatpush.bf16.msra.mxu0 %v380
    %699 = vmatpush.bf16.msra.mxu0 %v376
    %700 = vmatmul.bf16.gmra.mxu0 %v678
    %v701 = vpop.f32.mrf.mxu0
    %v702 = vadd.f32 0.0, %v701
    %v703 = vpop.f32.mrf.mxu0
    %704 = vdwg.mxu0
    %705 = vmatpush.bf16.msra.mxu0 %v405
    %706 = vmatpush.bf16.msra.mxu0 %v401
    %707 = vmatpush.bf16.msra.mxu0 %v397
    %708 = vmatpush.bf16.msra.mxu0 %v393
    %709 = vmatpush.bf16.msra.mxu0 %v389
    %710 = vmatpush.bf16.msra.mxu0 %v385
    %711 = vmatpush.bf16.msra.mxu0 %v381
    %712 = vmatpush.bf16.msra.mxu0 %v377
    %713 = vmatmul.bf16.gmra.mxu0 %v678
    %v714 = vpop.f32.mrf.mxu0
    %v715 = vadd.f32 0.0, %v714
    %v716 = vpop.f32.mrf.mxu0
    %717 = vdwg.mxu0
    %718 = vmatpush.bf16.msra.mxu0 %v406
    %719 = vmatpush.bf16.msra.mxu0 %v402
    %720 = vmatpush.bf16.msra.mxu0 %v398
    %721 = vmatpush.bf16.msra.mxu0 %v394
    %722 = vmatpush.bf16.msra.mxu0 %v390
    %723 = vmatpush.bf16.msra.mxu0 %v386
    %724 = vmatpush.bf16.msra.mxu0 %v382
    %725 = vmatpush.bf16.msra.mxu0 %v378
    %726 = vmatmul.bf16.gmra.mxu0 %v678
    %v727 = vpop.f32.mrf.mxu0
    %v728 = vadd.f32 0.0, %v727
    %v729 = vpop.f32.mrf.mxu0
    %730 = vdwg.mxu0
    %v731 = vadd.f32 %v146, %v689
    %v732 = vadd.f32 %v175, %v702
    %v733 = vadd.f32 %v204, %v715
    %v734 = vadd.f32 %v233, %v728
    %v735 = vxor.u32 %v731, 2147483648
    %v736 = vmul.f32 %v735, 1.442695
    %v737 = vpow.pop %v736
    %v738 = vadd.f32 %v737, 1.0
    %v739 = vrcp.pop %v738
    %v740 = vmul.f32 %v738, %v739
    %v741 = vsub.f32 1.0, %v740
    %v742 = vmul.f32 %v739, %v741
    %v743 = vadd.f32 %v739, %v742
    %vm744 = vweird.f32 %v738
    %vm745 = vweird.f32 %v739
    %vm746 = vmor %vm744, %vm745
    %v747 = vsel %vm746, %v739, %v743
    %v748 = vand.u32 2147483647, %v738
    %vm749 = vcmp.eq.f32.partialorder %v748, 8.507059e+37
    %v750 = vand.u32 %v738, 2147483648
    %v751 = vor.u32 1.1754944e-38, %v750
    %v752 = vsel %vm749, %v751, %v747
    %v753 = vmul.f32 1.0, %v752
    %v754 = vxor.u32 %v732, 2147483648
    %v755 = vmul.f32 %v754, 1.442695
    %v756 = vpow.pop %v755
    %v757 = vadd.f32 %v756, 1.0
    %v758 = vrcp.pop %v757
    %v759 = vmul.f32 %v757, %v758
    %v760 = vsub.f32 1.0, %v759
    %v761 = vmul.f32 %v758, %v760
    %v762 = vadd.f32 %v758, %v761
    %vm763 = vweird.f32 %v757
    %vm764 = vweird.f32 %v758
    %vm765 = vmor %vm763, %vm764
    %v766 = vsel %vm765, %v758, %v762
    %v767 = vand.u32 2147483647, %v757
    %vm768 = vcmp.eq.f32.partialorder %v767, 8.507059e+37
    %v769 = vand.u32 %v757, 2147483648
    %v770 = vor.u32 1.1754944e-38, %v769
    %v771 = vsel %vm768, %v770, %v766
    %v772 = vmul.f32 1.0, %v771
    %v773 = vtanh.pop %v733
    %v774 = vxor.u32 %v734, 2147483648
    %v775 = vmul.f32 %v774, 1.442695
    %v776 = vpow.pop %v775
    %v777 = vadd.f32 %v776, 1.0
    %v778 = vrcp.pop %v777
    %v779 = vmul.f32 %v777, %v778
    %v780 = vsub.f32 1.0, %v779
    %v781 = vmul.f32 %v778, %v780
    %v782 = vadd.f32 %v778, %v781
    %vm783 = vweird.f32 %v777
    %vm784 = vweird.f32 %v778
    %vm785 = vmor %vm783, %vm784
    %v786 = vsel %vm785, %v778, %v782
    %v787 = vand.u32 2147483647, %v777
    %vm788 = vcmp.eq.f32.partialorder %v787, 8.507059e+37
    %v789 = vand.u32 %v777, 2147483648
    %v790 = vor.u32 1.1754944e-38, %v789
    %v791 = vsel %vm788, %v790, %v786
    %v792 = vmul.f32 1.0, %v791
    %v793 = vmul.f32 %v772, %v675
    %v794 = vmul.f32 %v753, %v773
    %v795 = vadd.f32 %v793, %v794
    %v796 = vtanh.pop %v795
    %v797 = vmul.f32 %v792, %v796
    %v798 = vpack.c.bf16 %v797, %v797
    %799 = vmatpush.bf16.msra.mxu0 %v403
    %800 = vmatpush.bf16.msra.mxu0 %v399
    %801 = vmatpush.bf16.msra.mxu0 %v395
    %802 = vmatpush.bf16.msra.mxu0 %v391
    %803 = vmatpush.bf16.msra.mxu0 %v387
    %804 = vmatpush.bf16.msra.mxu0 %v383
    %805 = vmatpush.bf16.msra.mxu0 %v379
    %806 = vmatpush.bf16.msra.mxu0 %v375
    %807 = vmatmul.bf16.gmra.mxu0 %v798
    %v808 = vpop.f32.mrf.mxu0
    %v809 = vadd.f32 0.0, %v808
    %v810 = vpop.f32.mrf.mxu0
    %811 = vdwg.mxu0
    %812 = vmatpush.bf16.msra.mxu0 %v404
    %813 = vmatpush.bf16.msra.mxu0 %v400
    %814 = vmatpush.bf16.msra.mxu0 %v396
    %815 = vmatpush.bf16.msra.mxu0 %v392
    %816 = vmatpush.bf16.msra.mxu0 %v388
    %817 = vmatpush.bf16.msra.mxu0 %v384
    %818 = vmatpush.bf16.msra.mxu0 %v380
    %819 = vmatpush.bf16.msra.mxu0 %v376
    %820 = vmatmul.bf16.gmra.mxu0 %v798
    %v821 = vpop.f32.mrf.mxu0
    %v822 = vadd.f32 0.0, %v821
    %v823 = vpop.f32.mrf.mxu0
    %824 = vdwg.mxu0
    %825 = vmatpush.bf16.msra.mxu0 %v405
    %826 = vmatpush.bf16.msra.mxu0 %v401
    %827 = vmatpush.bf16.msra.mxu0 %v397
    %828 = vmatpush.bf16.msra.mxu0 %v393
    %829 = vmatpush.bf16.msra.mxu0 %v389
    %830 = vmatpush.bf16.msra.mxu0 %v385
    %831 = vmatpush.bf16.msra.mxu0 %v381
    %832 = vmatpush.bf16.msra.mxu0 %v377
    %833 = vmatmul.bf16.gmra.mxu0 %v798
    %v834 = vpop.f32.mrf.mxu0
    %v835 = vadd.f32 0.0, %v834
    %v836 = vpop.f32.mrf.mxu0
    %837 = vdwg.mxu0
    %838 = vmatpush.bf16.msra.mxu0 %v406
    %839 = vmatpush.bf16.msra.mxu0 %v402
    %840 = vmatpush.bf16.msra.mxu0 %v398
    %841 = vmatpush.bf16.msra.mxu0 %v394
    %842 = vmatpush.bf16.msra.mxu0 %v390
    %843 = vmatpush.bf16.msra.mxu0 %v386
    %844 = vmatpush.bf16.msra.mxu0 %v382
    %845 = vmatpush.bf16.msra.mxu0 %v378
    %846 = vmatmul.bf16.gmra.mxu0 %v798
    %v847 = vpop.f32.mrf.mxu0
    %v848 = vadd.f32 0.0, %v847
    %v849 = vpop.f32.mrf.mxu0
    %850 = vdwg.mxu0
    %v851 = vadd.f32 %v148, %v809
    %v852 = vadd.f32 %v177, %v822
    %v853 = vadd.f32 %v206, %v835
    %v854 = vadd.f32 %v235, %v848
    %v855 = vxor.u32 %v851, 2147483648
    %v856 = vmul.f32 %v855, 1.442695
    %v857 = vpow.pop %v856
    %v858 = vadd.f32 %v857, 1.0
    %v859 = vrcp.pop %v858
    %v860 = vmul.f32 %v858, %v859
    %v861 = vsub.f32 1.0, %v860
    %v862 = vmul.f32 %v859, %v861
    %v863 = vadd.f32 %v859, %v862
    %vm864 = vweird.f32 %v858
    %vm865 = vweird.f32 %v859
    %vm866 = vmor %vm864, %vm865
    %v867 = vsel %vm866, %v859, %v863
    %v868 = vand.u32 2147483647, %v858
    %vm869 = vcmp.eq.f32.partialorder %v868, 8.507059e+37
    %v870 = vand.u32 %v858, 2147483648
    %v871 = vor.u32 1.1754944e-38, %v870
    %v872 = vsel %vm869, %v871, %v867
    %v873 = vmul.f32 1.0, %v872
    %v874 = vxor.u32 %v852, 2147483648
    %v875 = vmul.f32 %v874, 1.442695
    %v876 = vpow.pop %v875
    %v877 = vadd.f32 %v876, 1.0
    %v878 = vrcp.pop %v877
    %v879 = vmul.f32 %v877, %v878
    %v880 = vsub.f32 1.0, %v879
    %v881 = vmul.f32 %v878, %v880
    %v882 = vadd.f32 %v878, %v881
    %vm883 = vweird.f32 %v877
    %vm884 = vweird.f32 %v878
    %vm885 = vmor %vm883, %vm884
    %v886 = vsel %vm885, %v878, %v882
    %v887 = vand.u32 2147483647, %v877
    %vm888 = vcmp.eq.f32.partialorder %v887, 8.507059e+37
    %v889 = vand.u32 %v877, 2147483648
    %v890 = vor.u32 1.1754944e-38, %v889
    %v891 = vsel %vm888, %v890, %v886
    %v892 = vmul.f32 1.0, %v891
    %v893 = vtanh.pop %v853
    %v894 = vxor.u32 %v854, 2147483648
    %v895 = vmul.f32 %v894, 1.442695
    %v896 = vpow.pop %v895
    %v897 = vadd.f32 %v896, 1.0
    %v898 = vrcp.pop %v897
    %v899 = vmul.f32 %v897, %v898
    %v900 = vsub.f32 1.0, %v899
    %v901 = vmul.f32 %v898, %v900
    %v902 = vadd.f32 %v898, %v901
    %vm903 = vweird.f32 %v897
    %vm904 = vweird.f32 %v898
    %vm905 = vmor %vm903, %vm904
    %v906 = vsel %vm905, %v898, %v902
    %v907 = vand.u32 2147483647, %v897
    %vm908 = vcmp.eq.f32.partialorder %v907, 8.507059e+37
    %v909 = vand.u32 %v897, 2147483648
    %v910 = vor.u32 1.1754944e-38, %v909
    %v911 = vsel %vm908, %v910, %v906
    %v912 = vmul.f32 1.0, %v911
    %v913 = vmul.f32 %v892, %v795
    %v914 = vmul.f32 %v873, %v893
    %v915 = vadd.f32 %v913, %v914
    %v916 = vtanh.pop %v915
    %v917 = vmul.f32 %v912, %v916
    %v918 = vpack.c.bf16 %v917, %v917
    %919 = vmatpush.bf16.msra.mxu0 %v403
    %920 = vmatpush.bf16.msra.mxu0 %v399
    %921 = vmatpush.bf16.msra.mxu0 %v395
    %922 = vmatpush.bf16.msra.mxu0 %v391
    %923 = vmatpush.bf16.msra.mxu0 %v387
    %924 = vmatpush.bf16.msra.mxu0 %v383
    %925 = vmatpush.bf16.msra.mxu0 %v379
    %926 = vmatpush.bf16.msra.mxu0 %v375
    %927 = vmatmul.bf16.gmra.mxu0 %v918
    %v928 = vpop.f32.mrf.mxu0
    %v929 = vadd.f32 0.0, %v928
    %v930 = vpop.f32.mrf.mxu0
    %931 = vdwg.mxu0
    %932 = vmatpush.bf16.msra.mxu0 %v404
    %933 = vmatpush.bf16.msra.mxu0 %v400
    %934 = vmatpush.bf16.msra.mxu0 %v396
    %935 = vmatpush.bf16.msra.mxu0 %v392
    %936 = vmatpush.bf16.msra.mxu0 %v388
    %937 = vmatpush.bf16.msra.mxu0 %v384
    %938 = vmatpush.bf16.msra.mxu0 %v380
    %939 = vmatpush.bf16.msra.mxu0 %v376
    %940 = vmatmul.bf16.gmra.mxu0 %v918
    %v941 = vpop.f32.mrf.mxu0
    %v942 = vadd.f32 0.0, %v941
    %v943 = vpop.f32.mrf.mxu0
    %944 = vdwg.mxu0
    %945 = vmatpush.bf16.msra.mxu0 %v405
    %946 = vmatpush.bf16.msra.mxu0 %v401
    %947 = vmatpush.bf16.msra.mxu0 %v397
    %948 = vmatpush.bf16.msra.mxu0 %v393
    %949 = vmatpush.bf16.msra.mxu0 %v389
    %950 = vmatpush.bf16.msra.mxu0 %v385
    %951 = vmatpush.bf16.msra.mxu0 %v381
    %952 = vmatpush.bf16.msra.mxu0 %v377
    %953 = vmatmul.bf16.gmra.mxu0 %v918
    %v954 = vpop.f32.mrf.mxu0
    %v955 = vadd.f32 0.0, %v954
    %v956 = vpop.f32.mrf.mxu0
    %957 = vdwg.mxu0
    %958 = vmatpush.bf16.msra.mxu0 %v406
    %959 = vmatpush.bf16.msra.mxu0 %v402
    %960 = vmatpush.bf16.msra.mxu0 %v398
    %961 = vmatpush.bf16.msra.mxu0 %v394
    %962 = vmatpush.bf16.msra.mxu0 %v390
    %963 = vmatpush.bf16.msra.mxu0 %v386
    %964 = vmatpush.bf16.msra.mxu0 %v382
    %965 = vmatpush.bf16.msra.mxu0 %v378
    %966 = vmatmul.bf16.gmra.mxu0 %v918
    %v967 = vpop.f32.mrf.mxu0
    %v968 = vadd.f32 0.0, %v967
    %v969 = vpop.f32.mrf.mxu0
    %970 = vdwg.mxu0
    %v971 = vadd.f32 %v151, %v929
    %v972 = vadd.f32 %v180, %v942
    %v973 = vadd.f32 %v209, %v955
    %v974 = vadd.f32 %v238, %v968
    %v975 = vxor.u32 %v971, 2147483648
    %v976 = vmul.f32 %v975, 1.442695
    %v977 = vpow.pop %v976
    %v978 = vadd.f32 %v977, 1.0
    %v979 = vrcp.pop %v978
    %v980 = vmul.f32 %v978, %v979
    %v981 = vsub.f32 1.0, %v980
    %v982 = vmul.f32 %v979, %v981
    %v983 = vadd.f32 %v979, %v982
    %vm984 = vweird.f32 %v978
    %vm985 = vweird.f32 %v979
    %vm986 = vmor %vm984, %vm985
    %v987 = vsel %vm986, %v979, %v983
    %v988 = vand.u32 2147483647, %v978
    %vm989 = vcmp.eq.f32.partialorder %v988, 8.507059e+37
    %v990 = vand.u32 %v978, 2147483648
    %v991 = vor.u32 1.1754944e-38, %v990
    %v992 = vsel %vm989, %v991, %v987
    %v993 = vmul.f32 1.0, %v992
    %v994 = vxor.u32 %v972, 2147483648
    %v995 = vmul.f32 %v994, 1.442695
    %v996 = vpow.pop %v995
    %v997 = vadd.f32 %v996, 1.0
    %v998 = vrcp.pop %v997
    %v999 = vmul.f32 %v997, %v998
    %v1000 = vsub.f32 1.0, %v999
    %v1001 = vmul.f32 %v998, %v1000
    %v1002 = vadd.f32 %v998, %v1001
    %vm1003 = vweird.f32 %v997
    %vm1004 = vweird.f32 %v998
    %vm1005 = vmor %vm1003, %vm1004
    %v1006 = vsel %vm1005, %v998, %v1002
    %v1007 = vand.u32 2147483647, %v997
    %vm1008 = vcmp.eq.f32.partialorder %v1007, 8.507059e+37
    %v1009 = vand.u32 %v997, 2147483648
    %v1010 = vor.u32 1.1754944e-38, %v1009
    %v1011 = vsel %vm1008, %v1010, %v1006
    %v1012 = vmul.f32 1.0, %v1011
    %v1013 = vtanh.pop %v973
    %v1014 = vxor.u32 %v974, 2147483648
    %v1015 = vmul.f32 %v1014, 1.442695
    %v1016 = vpow.pop %v1015
    %v1017 = vadd.f32 %v1016, 1.0
    %v1018 = vrcp.pop %v1017
    %v1019 = vmul.f32 %v1017, %v1018
    %v1020 = vsub.f32 1.0, %v1019
    %v1021 = vmul.f32 %v1018, %v1020
    %v1022 = vadd.f32 %v1018, %v1021
    %vm1023 = vweird.f32 %v1017
    %vm1024 = vweird.f32 %v1018
    %vm1025 = vmor %vm1023, %vm1024
    %v1026 = vsel %vm1025, %v1018, %v1022
    %v1027 = vand.u32 2147483647, %v1017
    %vm1028 = vcmp.eq.f32.partialorder %v1027, 8.507059e+37
    %v1029 = vand.u32 %v1017, 2147483648
    %v1030 = vor.u32 1.1754944e-38, %v1029
    %v1031 = vsel %vm1028, %v1030, %v1026
    %v1032 = vmul.f32 1.0, %v1031
    %v1033 = vmul.f32 %v1012, %v915
    %v1034 = vmul.f32 %v993, %v1013
    %v1035 = vadd.f32 %v1033, %v1034
    %v1036 = vtanh.pop %v1035
    %v1037 = vmul.f32 %v1032, %v1036
    %v1038 = vpack.c.bf16 %v1037, %v1037
    %1039 = vmatpush.bf16.msra.mxu0 %v403
    %1040 = vmatpush.bf16.msra.mxu0 %v399
    %1041 = vmatpush.bf16.msra.mxu0 %v395
    %1042 = vmatpush.bf16.msra.mxu0 %v391
    %1043 = vmatpush.bf16.msra.mxu0 %v387
    %1044 = vmatpush.bf16.msra.mxu0 %v383
    %1045 = vmatpush.bf16.msra.mxu0 %v379
    %1046 = vmatpush.bf16.msra.mxu0 %v375
    %1047 = vmatmul.bf16.gmra.mxu0 %v1038
    %v1048 = vpop.f32.mrf.mxu0
    %v1049 = vadd.f32 0.0, %v1048
    %v1050 = vpop.f32.mrf.mxu0
    %1051 = vdwg.mxu0
    %1052 = vmatpush.bf16.msra.mxu0 %v404
    %1053 = vmatpush.bf16.msra.mxu0 %v400
    %1054 = vmatpush.bf16.msra.mxu0 %v396
    %1055 = vmatpush.bf16.msra.mxu0 %v392
    %1056 = vmatpush.bf16.msra.mxu0 %v388
    %1057 = vmatpush.bf16.msra.mxu0 %v384
    %1058 = vmatpush.bf16.msra.mxu0 %v380
    %1059 = vmatpush.bf16.msra.mxu0 %v376
    %1060 = vmatmul.bf16.gmra.mxu0 %v1038
    %v1061 = vpop.f32.mrf.mxu0
    %v1062 = vadd.f32 0.0, %v1061
    %v1063 = vpop.f32.mrf.mxu0
    %1064 = vdwg.mxu0
    %1065 = vmatpush.bf16.msra.mxu0 %v405
    %1066 = vmatpush.bf16.msra.mxu0 %v401
    %1067 = vmatpush.bf16.msra.mxu0 %v397
    %1068 = vmatpush.bf16.msra.mxu0 %v393
    %1069 = vmatpush.bf16.msra.mxu0 %v389
    %1070 = vmatpush.bf16.msra.mxu0 %v385
    %1071 = vmatpush.bf16.msra.mxu0 %v381
    %1072 = vmatpush.bf16.msra.mxu0 %v377
    %1073 = vmatmul.bf16.gmra.mxu0 %v1038
    %v1074 = vpop.f32.mrf.mxu0
    %v1075 = vadd.f32 0.0, %v1074
    %v1076 = vpop.f32.mrf.mxu0
    %1077 = vdwg.mxu0
    %1078 = vmatpush.bf16.msra.mxu0 %v406
    %1079 = vmatpush.bf16.msra.mxu0 %v402
    %1080 = vmatpush.bf16.msra.mxu0 %v398
    %1081 = vmatpush.bf16.msra.mxu0 %v394
    %1082 = vmatpush.bf16.msra.mxu0 %v390
    %1083 = vmatpush.bf16.msra.mxu0 %v386
    %1084 = vmatpush.bf16.msra.mxu0 %v382
    %1085 = vmatpush.bf16.msra.mxu0 %v378
    %1086 = vmatmul.bf16.gmra.mxu0 %v1038
    %v1087 = vpop.f32.mrf.mxu0
    %v1088 = vadd.f32 0.0, %v1087
    %v1089 = vpop.f32.mrf.mxu0
    %1090 = vdwg.mxu0
    %v1091 = vadd.f32 %v153, %v1049
    %v1092 = vadd.f32 %v182, %v1062
    %v1093 = vadd.f32 %v211, %v1075
    %v1094 = vadd.f32 %v240, %v1088
    %v1095 = vxor.u32 %v1091, 2147483648
    %v1096 = vmul.f32 %v1095, 1.442695
    %v1097 = vpow.pop %v1096
    %v1098 = vadd.f32 %v1097, 1.0
    %v1099 = vrcp.pop %v1098
    %v1100 = vmul.f32 %v1098, %v1099
    %v1101 = vsub.f32 1.0, %v1100
    %v1102 = vmul.f32 %v1099, %v1101
    %v1103 = vadd.f32 %v1099, %v1102
    %vm1104 = vweird.f32 %v1098
    %vm1105 = vweird.f32 %v1099
    %vm1106 = vmor %vm1104, %vm1105
    %v1107 = vsel %vm1106, %v1099, %v1103
    %v1108 = vand.u32 2147483647, %v1098
    %vm1109 = vcmp.eq.f32.partialorder %v1108, 8.507059e+37
    %v1110 = vand.u32 %v1098, 2147483648
    %v1111 = vor.u32 1.1754944e-38, %v1110
    %v1112 = vsel %vm1109, %v1111, %v1107
    %v1113 = vmul.f32 1.0, %v1112
    %v1114 = vxor.u32 %v1092, 2147483648
    %v1115 = vmul.f32 %v1114, 1.442695
    %v1116 = vpow.pop %v1115
    %v1117 = vadd.f32 %v1116, 1.0
    %v1118 = vrcp.pop %v1117
    %v1119 = vmul.f32 %v1117, %v1118
    %v1120 = vsub.f32 1.0, %v1119
    %v1121 = vmul.f32 %v1118, %v1120
    %v1122 = vadd.f32 %v1118, %v1121
    %vm1123 = vweird.f32 %v1117
    %vm1124 = vweird.f32 %v1118
    %vm1125 = vmor %vm1123, %vm1124
    %v1126 = vsel %vm1125, %v1118, %v1122
    %v1127 = vand.u32 2147483647, %v1117
    %vm1128 = vcmp.eq.f32.partialorder %v1127, 8.507059e+37
    %v1129 = vand.u32 %v1117, 2147483648
    %v1130 = vor.u32 1.1754944e-38, %v1129
    %v1131 = vsel %vm1128, %v1130, %v1126
    %v1132 = vmul.f32 1.0, %v1131
    %v1133 = vtanh.pop %v1093
    %v1134 = vxor.u32 %v1094, 2147483648
    %v1135 = vmul.f32 %v1134, 1.442695
    %v1136 = vpow.pop %v1135
    %v1137 = vadd.f32 %v1136, 1.0
    %v1138 = vrcp.pop %v1137
    %v1139 = vmul.f32 %v1137, %v1138
    %v1140 = vsub.f32 1.0, %v1139
    %v1141 = vmul.f32 %v1138, %v1140
    %v1142 = vadd.f32 %v1138, %v1141
    %vm1143 = vweird.f32 %v1137
    %vm1144 = vweird.f32 %v1138
    %vm1145 = vmor %vm1143, %vm1144
    %v1146 = vsel %vm1145, %v1138, %v1142
    %v1147 = vand.u32 2147483647, %v1137
    %vm1148 = vcmp.eq.f32.partialorder %v1147, 8.507059e+37
    %v1149 = vand.u32 %v1137, 2147483648
    %v1150 = vor.u32 1.1754944e-38, %v1149
    %v1151 = vsel %vm1148, %v1150, %v1146
    %v1152 = vmul.f32 1.0, %v1151
    %v1153 = vmul.f32 %v1132, %v1035
    %v1154 = vmul.f32 %v1113, %v1133
    %v1155 = vadd.f32 %v1153, %v1154
    %v1156 = vtanh.pop %v1155
    %v1157 = vmul.f32 %v1152, %v1156
    %v1158 = vpack.c.bf16 %v1157, %v1157
    %1159 = vmatpush.bf16.msra.mxu0 %v403
    %1160 = vmatpush.bf16.msra.mxu0 %v399
    %1161 = vmatpush.bf16.msra.mxu0 %v395
    %1162 = vmatpush.bf16.msra.mxu0 %v391
    %1163 = vmatpush.bf16.msra.mxu0 %v387
    %1164 = vmatpush.bf16.msra.mxu0 %v383
    %1165 = vmatpush.bf16.msra.mxu0 %v379
    %1166 = vmatpush.bf16.msra.mxu0 %v375
    %1167 = vmatmul.bf16.gmra.mxu0 %v1158
    %v1168 = vpop.f32.mrf.mxu0
    %v1169 = vadd.f32 0.0, %v1168
    %v1170 = vpop.f32.mrf.mxu0
    %1171 = vdwg.mxu0
    %1172 = vmatpush.bf16.msra.mxu0 %v404
    %1173 = vmatpush.bf16.msra.mxu0 %v400
    %1174 = vmatpush.bf16.msra.mxu0 %v396
    %1175 = vmatpush.bf16.msra.mxu0 %v392
    %1176 = vmatpush.bf16.msra.mxu0 %v388
    %1177 = vmatpush.bf16.msra.mxu0 %v384
    %1178 = vmatpush.bf16.msra.mxu0 %v380
    %1179 = vmatpush.bf16.msra.mxu0 %v376
    %1180 = vmatmul.bf16.gmra.mxu0 %v1158
    %v1181 = vpop.f32.mrf.mxu0
    %v1182 = vadd.f32 0.0, %v1181
    %v1183 = vpop.f32.mrf.mxu0
    %1184 = vdwg.mxu0
    %1185 = vmatpush.bf16.msra.mxu0 %v405
    %1186 = vmatpush.bf16.msra.mxu0 %v401
    %1187 = vmatpush.bf16.msra.mxu0 %v397
    %1188 = vmatpush.bf16.msra.mxu0 %v393
    %1189 = vmatpush.bf16.msra.mxu0 %v389
    %1190 = vmatpush.bf16.msra.mxu0 %v385
    %1191 = vmatpush.bf16.msra.mxu0 %v381
    %1192 = vmatpush.bf16.msra.mxu0 %v377
    %1193 = vmatmul.bf16.gmra.mxu0 %v1158
    %v1194 = vpop.f32.mrf.mxu0
    %v1195 = vadd.f32 0.0, %v1194
    %v1196 = vpop.f32.mrf.mxu0
    %1197 = vdwg.mxu0
    %1198 = vmatpush.bf16.msra.mxu0 %v406
    %1199 = vmatpush.bf16.msra.mxu0 %v402
    %1200 = vmatpush.bf16.msra.mxu0 %v398
    %1201 = vmatpush.bf16.msra.mxu0 %v394
    %1202 = vmatpush.bf16.msra.mxu0 %v390
    %1203 = vmatpush.bf16.msra.mxu0 %v386
    %1204 = vmatpush.bf16.msra.mxu0 %v382
    %1205 = vmatpush.bf16.msra.mxu0 %v378
    %1206 = vmatmul.bf16.gmra.mxu0 %v1158
    %v1207 = vpop.f32.mrf.mxu0
    %v1208 = vadd.f32 0.0, %v1207
    %v1209 = vpop.f32.mrf.mxu0
    %1210 = vdwg.mxu0
    %v1211 = vadd.f32 %v156, %v1169
    %v1212 = vadd.f32 %v185, %v1182
    %v1213 = vadd.f32 %v214, %v1195
    %v1214 = vadd.f32 %v243, %v1208
    %v1215 = vxor.u32 %v1211, 2147483648
    %v1216 = vmul.f32 %v1215, 1.442695
    %v1217 = vpow.pop %v1216
    %v1218 = vadd.f32 %v1217, 1.0
    %v1219 = vrcp.pop %v1218
    %v1220 = vmul.f32 %v1218, %v1219
    %v1221 = vsub.f32 1.0, %v1220
    %v1222 = vmul.f32 %v1219, %v1221
    %v1223 = vadd.f32 %v1219, %v1222
    %vm1224 = vweird.f32 %v1218
    %vm1225 = vweird.f32 %v1219
    %vm1226 = vmor %vm1224, %vm1225
    %v1227 = vsel %vm1226, %v1219, %v1223
    %v1228 = vand.u32 2147483647, %v1218
    %vm1229 = vcmp.eq.f32.partialorder %v1228, 8.507059e+37
    %v1230 = vand.u32 %v1218, 2147483648
    %v1231 = vor.u32 1.1754944e-38, %v1230
    %v1232 = vsel %vm1229, %v1231, %v1227
    %v1233 = vmul.f32 1.0, %v1232
    %v1234 = vxor.u32 %v1212, 2147483648
    %v1235 = vmul.f32 %v1234, 1.442695
    %v1236 = vpow.pop %v1235
    %v1237 = vadd.f32 %v1236, 1.0
    %v1238 = vrcp.pop %v1237
    %v1239 = vmul.f32 %v1237, %v1238
    %v1240 = vsub.f32 1.0, %v1239
    %v1241 = vmul.f32 %v1238, %v1240
    %v1242 = vadd.f32 %v1238, %v1241
    %vm1243 = vweird.f32 %v1237
    %vm1244 = vweird.f32 %v1238
    %vm1245 = vmor %vm1243, %vm1244
    %v1246 = vsel %vm1245, %v1238, %v1242
    %v1247 = vand.u32 2147483647, %v1237
    %vm1248 = vcmp.eq.f32.partialorder %v1247, 8.507059e+37
    %v1249 = vand.u32 %v1237, 2147483648
    %v1250 = vor.u32 1.1754944e-38, %v1249
    %v1251 = vsel %vm1248, %v1250, %v1246
    %v1252 = vmul.f32 1.0, %v1251
    %v1253 = vtanh.pop %v1213
    %v1254 = vxor.u32 %v1214, 2147483648
    %v1255 = vmul.f32 %v1254, 1.442695
    %v1256 = vpow.pop %v1255
    %v1257 = vadd.f32 %v1256, 1.0
    %v1258 = vrcp.pop %v1257
    %v1259 = vmul.f32 %v1257, %v1258
    %v1260 = vsub.f32 1.0, %v1259
    %v1261 = vmul.f32 %v1258, %v1260
    %v1262 = vadd.f32 %v1258, %v1261
    %vm1263 = vweird.f32 %v1257
    %vm1264 = vweird.f32 %v1258
    %vm1265 = vmor %vm1263, %vm1264
    %v1266 = vsel %vm1265, %v1258, %v1262
    %v1267 = vand.u32 2147483647, %v1257
    %vm1268 = vcmp.eq.f32.partialorder %v1267, 8.507059e+37
    %v1269 = vand.u32 %v1257, 2147483648
    %v1270 = vor.u32 1.1754944e-38, %v1269
    %v1271 = vsel %vm1268, %v1270, %v1266
    %v1272 = vmul.f32 1.0, %v1271
    %v1273 = vmul.f32 %v1252, %v1155
    %v1274 = vmul.f32 %v1233, %v1253
    %v1275 = vadd.f32 %v1273, %v1274
    %v1276 = vtanh.pop %v1275
    %v1277 = vmul.f32 %v1272, %v1276
    %v1278 = vpack.c.bf16 %v1277, %v1277
    %1279 = vmatpush.bf16.msra.mxu0 %v403
    %1280 = vmatpush.bf16.msra.mxu0 %v399
    %1281 = vmatpush.bf16.msra.mxu0 %v395
    %1282 = vmatpush.bf16.msra.mxu0 %v391
    %1283 = vmatpush.bf16.msra.mxu0 %v387
    %1284 = vmatpush.bf16.msra.mxu0 %v383
    %1285 = vmatpush.bf16.msra.mxu0 %v379
    %1286 = vmatpush.bf16.msra.mxu0 %v375
    %1287 = vmatmul.bf16.gmra.mxu0 %v1278
    %v1288 = vpop.f32.mrf.mxu0
    %v1289 = vadd.f32 0.0, %v1288
    %v1290 = vpop.f32.mrf.mxu0
    %1291 = vdwg.mxu0
    %1292 = vmatpush.bf16.msra.mxu0 %v404
    %1293 = vmatpush.bf16.msra.mxu0 %v400
    %1294 = vmatpush.bf16.msra.mxu0 %v396
    %1295 = vmatpush.bf16.msra.mxu0 %v392
    %1296 = vmatpush.bf16.msra.mxu0 %v388
    %1297 = vmatpush.bf16.msra.mxu0 %v384
    %1298 = vmatpush.bf16.msra.mxu0 %v380
    %1299 = vmatpush.bf16.msra.mxu0 %v376
    %1300 = vmatmul.bf16.gmra.mxu0 %v1278
    %v1301 = vpop.f32.mrf.mxu0
    %v1302 = vadd.f32 0.0, %v1301
    %v1303 = vpop.f32.mrf.mxu0
    %1304 = vdwg.mxu0
    %1305 = vmatpush.bf16.msra.mxu0 %v405
    %1306 = vmatpush.bf16.msra.mxu0 %v401
    %1307 = vmatpush.bf16.msra.mxu0 %v397
    %1308 = vmatpush.bf16.msra.mxu0 %v393
    %1309 = vmatpush.bf16.msra.mxu0 %v389
    %1310 = vmatpush.bf16.msra.mxu0 %v385
    %1311 = vmatpush.bf16.msra.mxu0 %v381
    %1312 = vmatpush.bf16.msra.mxu0 %v377
    %1313 = vmatmul.bf16.gmra.mxu0 %v1278
    %v1314 = vpop.f32.mrf.mxu0
    %v1315 = vadd.f32 0.0, %v1314
    %v1316 = vpop.f32.mrf.mxu0
    %1317 = vdwg.mxu0
    %1318 = vmatpush.bf16.msra.mxu0 %v406
    %1319 = vmatpush.bf16.msra.mxu0 %v402
    %1320 = vmatpush.bf16.msra.mxu0 %v398
    %1321 = vmatpush.bf16.msra.mxu0 %v394
    %1322 = vmatpush.bf16.msra.mxu0 %v390
    %1323 = vmatpush.bf16.msra.mxu0 %v386
    %1324 = vmatpush.bf16.msra.mxu0 %v382
    %1325 = vmatpush.bf16.msra.mxu0 %v378
    %1326 = vmatmul.bf16.gmra.mxu0 %v1278
    %v1327 = vpop.f32.mrf.mxu0
    %v1328 = vadd.f32 0.0, %v1327
    %v1329 = vpop.f32.mrf.mxu0
    %1330 = vdwg.mxu0
    %v1331 = vadd.f32 %v158, %v1289
    %v1332 = vadd.f32 %v187, %v1302
    %v1333 = vadd.f32 %v216, %v1315
    %v1334 = vadd.f32 %v245, %v1328
    %v1335 = vxor.u32 %v1331, 2147483648
    %v1336 = vmul.f32 %v1335, 1.442695
    %v1337 = vpow.pop %v1336
    %v1338 = vadd.f32 %v1337, 1.0
    %v1339 = vrcp.pop %v1338
    %v1340 = vmul.f32 %v1338, %v1339
    %v1341 = vsub.f32 1.0, %v1340
    %v1342 = vmul.f32 %v1339, %v1341
    %v1343 = vadd.f32 %v1339, %v1342
    %vm1344 = vweird.f32 %v1338
    %vm1345 = vweird.f32 %v1339
    %vm1346 = vmor %vm1344, %vm1345
    %v1347 = vsel %vm1346, %v1339, %v1343
    %v1348 = vand.u32 2147483647, %v1338
    %vm1349 = vcmp.eq.f32.partialorder %v1348, 8.507059e+37
    %v1350 = vand.u32 %v1338, 2147483648
    %v1351 = vor.u32 1.1754944e-38, %v1350
    %v1352 = vsel %vm1349, %v1351, %v1347
    %v1353 = vmul.f32 1.0, %v1352
    %v1354 = vxor.u32 %v1332, 2147483648
    %v1355 = vmul.f32 %v1354, 1.442695
    %v1356 = vpow.pop %v1355
    %v1357 = vadd.f32 %v1356, 1.0
    %v1358 = vrcp.pop %v1357
    %v1359 = vmul.f32 %v1357, %v1358
    %v1360 = vsub.f32 1.0, %v1359
    %v1361 = vmul.f32 %v1358, %v1360
    %v1362 = vadd.f32 %v1358, %v1361
    %vm1363 = vweird.f32 %v1357
    %vm1364 = vweird.f32 %v1358
    %vm1365 = vmor %vm1363, %vm1364
    %v1366 = vsel %vm1365, %v1358, %v1362
    %v1367 = vand.u32 2147483647, %v1357
    %vm1368 = vcmp.eq.f32.partialorder %v1367, 8.507059e+37
    %v1369 = vand.u32 %v1357, 2147483648
    %v1370 = vor.u32 1.1754944e-38, %v1369
    %v1371 = vsel %vm1368, %v1370, %v1366
    %v1372 = vmul.f32 1.0, %v1371
    %v1373 = vtanh.pop %v1333
    %v1374 = vxor.u32 %v1334, 2147483648
    %v1375 = vmul.f32 %v1374, 1.442695
    %v1376 = vpow.pop %v1375
    %v1377 = vadd.f32 %v1376, 1.0
    %v1378 = vrcp.pop %v1377
    %v1379 = vmul.f32 %v1377, %v1378
    %v1380 = vsub.f32 1.0, %v1379
    %v1381 = vmul.f32 %v1378, %v1380
    %v1382 = vadd.f32 %v1378, %v1381
    %vm1383 = vweird.f32 %v1377
    %vm1384 = vweird.f32 %v1378
    %vm1385 = vmor %vm1383, %vm1384
    %v1386 = vsel %vm1385, %v1378, %v1382
    %v1387 = vand.u32 2147483647, %v1377
    %vm1388 = vcmp.eq.f32.partialorder %v1387, 8.507059e+37
    %v1389 = vand.u32 %v1377, 2147483648
    %v1390 = vor.u32 1.1754944e-38, %v1389
    %v1391 = vsel %vm1388, %v1390, %v1386
    %v1392 = vmul.f32 1.0, %v1391
    %v1393 = vmul.f32 %v1372, %v1275
    %v1394 = vmul.f32 %v1353, %v1373
    %v1395 = vadd.f32 %v1393, %v1394
    %v1396 = vtanh.pop %v1395
    %v1397 = vmul.f32 %v1392, %v1396
    %v1398 = vpack.c.bf16 %v1397, %v1397
    %v1399 = vld [vmem:[%s4] sm:$0xf]
    %v1400 = vld [vmem:[%s4 + $0x4] sm:$0xf]
    %v1401 = vld [vmem:[%s4 + $0x8] sm:$0xf]
    %v1402 = vld [vmem:[%s4 + $0xc] sm:$0xf]
    %v1403 = vld [vmem:[%s4 + $0x10] sm:$0xf]
    %v1404 = vld [vmem:[%s4 + $0x14] sm:$0xf]
    %v1405 = vld [vmem:[%s4 + $0x18] sm:$0xf]
    %v1406 = vld [vmem:[%s4 + $0x1c] sm:$0xf]
    %v1407 = vld [vmem:[%s4 + $0x20] sm:$0xf]
    %v1408 = vld [vmem:[%s4 + $0x24] sm:$0xf]
    %v1409 = vld [vmem:[%s4 + $0x28] sm:$0xf]
    %v1410 = vld [vmem:[%s4 + $0x2c] sm:$0xf]
    %v1411 = vld [vmem:[%s4 + $0x30] sm:$0xf]
    %v1412 = vld [vmem:[%s4 + $0x34] sm:$0xf]
    %v1413 = vld [vmem:[%s4 + $0x38] sm:$0xf]
    %v1414 = vld [vmem:[%s4 + $0x3c] sm:$0xf]
    %v1415 = vld [vmem:[%s5] sm:$0x1]
    %v1417 = vperm.slane %v1415, 0
    %v1435 = vunpack.c.l.b16 %v1399
    %v1436 = vunpack.c.l.b16 %v1400
    %v1437 = vunpack.c.l.b16 %v1401
    %v1438 = vunpack.c.l.b16 %v1402
    %v1439 = vunpack.c.l.b16 %v1403
    %v1440 = vunpack.c.l.b16 %v1404
    %v1441 = vunpack.c.l.b16 %v1405
    %v1442 = vunpack.c.l.b16 %v1406
    %v1443 = vunpack.c.l.b16 %v1407
    %v1444 = vunpack.c.l.b16 %v1408
    %v1445 = vunpack.c.l.b16 %v1409
    %v1446 = vunpack.c.l.b16 %v1410
    %v1447 = vunpack.c.l.b16 %v1411
    %v1448 = vunpack.c.l.b16 %v1412
    %v1449 = vunpack.c.l.b16 %v1413
    %v1450 = vunpack.c.l.b16 %v1414
    %v1451 = vpack.c.b16 %v1436, %v1435
    %v1452 = vpack.c.b16 %v1438, %v1437
    %v1453 = vpack.c.b16 %v1440, %v1439
    %v1454 = vpack.c.b16 %v1442, %v1441
    %v1455 = vpack.c.b16 %v1444, %v1443
    %v1456 = vpack.c.b16 %v1446, %v1445
    %v1457 = vpack.c.b16 %v1448, %v1447
    %v1458 = vpack.c.b16 %v1450, %v1449
    %1467 = vmatpush.bf16.msra.mxu0 %v1458
    %1468 = vmatpush.bf16.msra.mxu0 %v1457
    %1469 = vmatpush.bf16.msra.mxu0 %v1456
    %1470 = vmatpush.bf16.msra.mxu0 %v1455
    %1471 = vmatpush.bf16.msra.mxu0 %v1454
    %1472 = vmatpush.bf16.msra.mxu0 %v1453
    %1473 = vmatpush.bf16.msra.mxu0 %v1452
    %1474 = vmatpush.bf16.msra.mxu0 %v1451
    %1475 = vmatmul.bf16.gmra.mxu0 %v1398
    %v1476 = vpop.f32.mrf.mxu0
    %v1477 = vadd.f32 %v1417, %v1476
    %v1478 = vpop.f32.mrf.mxu0
    %1479 = vdwg.mxu0
    %1480 = vst [vmem:[%s6] sm:$0xff] %v1477
    // Predicated region
    $region34: #{_lambda_.1} parent=1 // pred_check
      _
    $region35: #{_lambda_.1} parent=1 // pred_check_branch
      %1482 = sbr.rel (0) target = $region37
    $region36: #{_lambda_.1} parent=1 // pred_region
      _
    $region37: #{_lambda_.1} parent=1 // pred_fallthru
      _
    // Predicated region
    $region38: #{_lambda_.1} parent=1 // pred_check
      _
    $region39: #{_lambda_.1} parent=1 // pred_check_branch
      %1484 = sbr.rel (0) target = $region41
    $region40: #{_lambda_.1} parent=1 // pred_region
      _
    $region41: #{_lambda_.1} parent=1 // pred_fallthru
      _
    %1485 = vsyncpa [#allocation3], 1
    %1486 = vsyncpa [#allocation5], 1

</llo_original>
